<compile_context>
chip_gen: v7x
topology: tpu7x:2x2x1
jax: 0.10.0
libtpu: 0.0.40
codegen_flags: <defaults>
</compile_context>

<pallas_src>
import math
import jax
import jax.numpy as jnp
from jax.experimental import pallas as pl
from jax.experimental.pallas import tpu as pltpu


def _round_up(a, m):
    return ((a + m - 1) // m) * m


# ---------------------------------------------------------------------------
# Pallas kernel: bilinear interpolation (f32) + grouped matmul (bf16/MXU) + bias
# ---------------------------------------------------------------------------
def _deform_conv_kernel(vlt_ref, vrt_ref, vlb_ref, vrb_ref,
                        fcol_ref, frow_ref, w_ref, b_ref, o_ref):
    # block shapes:
    #   corners : (1, Cg, K, TN)  bf16
    #   fracs   : (1, K, TN)      f32
    #   weight  : (1, Cg, OCg, K) bf16
    #   bias    : (1, OCg, 1)     f32
    #   out     : (1, OCg, TN)    f32
    Cg = vlt_ref.shape[1]
    OCg = o_ref.shape[1]
    TN = o_ref.shape[2]

    fc = fcol_ref[0]                       # (K, TN) fractional part along width
    fr = frow_ref[0]                       # (K, TN) fractional part along height

    acc = jnp.zeros((OCg, TN), jnp.float32)
    # Static unroll over channels-per-group: only leading-dim (aligned) indexing,
    # frac broadcast is implicit (same (K, TN) shape per channel).
    # TODO(synk): switch to lax.fori_loop with dynamic leading-dim indexing if Cg
    #             ever gets large enough for code size to matter.
    for cg in range(Cg):
        lt = vlt_ref[0, cg].astype(jnp.float32)     # (K, TN)
        rt = vrt_ref[0, cg].astype(jnp.float32)
        lb = vlb_ref[0, cg].astype(jnp.float32)
        rb = vrb_ref[0, cg].astype(jnp.float32)
        top = lt + fc * (rt - lt)
        bot = lb + fc * (rb - lb)
        mapped = top + fr * (bot - top)             # (K, TN) f32
        acc = acc + jnp.dot(w_ref[0, cg],           # (OCg, K) bf16
                            mapped.astype(jnp.bfloat16),
                            preferred_element_type=jnp.float32)

    o_ref[0] = (acc + b_ref[0]).astype(o_ref.dtype)


# ---------------------------------------------------------------------------
# JAX glue: build deformable-im2col corner slabs (matches torch reference)
# ---------------------------------------------------------------------------
def _prepare_im2col(x, offset, weight, bias, stride, padding, dilation,
                    slab_dtype=jnp.bfloat16):
    B, C, H, W = x.shape
    OC, _, KH, KW = weight.shape
    K = KH * KW
    G = offset.shape[1] // (2 * K)
    Cg = C // G
    OCg = OC // G
    OH, OW = offset.shape[-2], offset.shape[-1]
    sh, sw = stride
    ph, pw = padding
    dh, dw = dilation
    N = B * OH * OW

    # base sampling grid  [OH, OW, KH, KW]  (K index = kh*KW + kw)
    oh_i = jnp.arange(OH, dtype=jnp.float32)
    ow_i = jnp.arange(OW, dtype=jnp.float32)
    kh_i = jnp.arange(KH, dtype=jnp.float32)
    kw_i = jnp.arange(KW, dtype=jnp.float32)
    base_i = (-ph + oh_i[:, None, None, None] * sh) + kh_i[None, None, :, None] * dh
    base_j = (-pw + ow_i[None, :, None, None] * sw) + kw_i[None, None, None, :] * dw
    base_i = jnp.broadcast_to(base_i, (OH, OW, KH, KW))
    base_j = jnp.broadcast_to(base_j, (OH, OW, KH, KW))
    base = jnp.stack([base_i, base_j], axis=-1).reshape(1, 1, OH, OW, K, 2)

    # offsets: [B, 2*G*K, OH, OW] -> [B, G, OH, OW, K, 2]
    off = offset.reshape(B, G, K, 2, OH, OW).transpose(0, 1, 4, 5, 2, 3)
    coord = off + base                                    # float sample coords
    lt = jnp.floor(coord).astype(jnp.int32)
    frac = (coord - lt.astype(jnp.float32)).astype(jnp.float32)  # [...,0]=row [...,1]=col

    ci_lt, cj_lt = lt[..., 0], lt[..., 1]
    ci_rb, cj_rb = ci_lt + 1, cj_lt + 1

    xg = x.reshape(B, G, Cg, H * W)

    def sample(ci, cj):
        valid = (ci >= 0) & (ci < H) & (cj >= 0) & (cj < W)
        lin = jnp.clip(ci, 0, H - 1) * W + jnp.clip(cj, 0, W - 1)   # [B,G,OH,OW,K]
        lin = lin.reshape(B, G, 1, OH * OW * K)
        g = jnp.take_along_axis(
            xg, jnp.broadcast_to(lin, (B, G, Cg, OH * OW * K)), axis=3)
        g = g.reshape(B, G, Cg, OH, OW, K)
        g = jnp.where(valid.reshape(B, G, 1, OH, OW, K), g, 0)
        # -> [G, Cg, K, N]  (column order n = b*OH*OW + oh*OW + ow)
        return g.transpose(1, 2, 5, 0, 3, 4).reshape(G, Cg, K, N).astype(slab_dtype)

    v_lt = sample(ci_lt, cj_lt)
    v_rt = sample(ci_lt, cj_rb)
    v_lb = sample(ci_rb, cj_lt)
    v_rb = sample(ci_rb, cj_rb)

    def frac_slab(f):                                     # [B,G,OH,OW,K] -> [G,K,N]
        return f.transpose(1, 4, 0, 2, 3).reshape(G, K, N).astype(jnp.float32)

    frow = frac_slab(frac[..., 0])
    fcol = frac_slab(frac[..., 1])

    # weight: [OC, Cg, KH, KW] -> [G, Cg, OCg, K]   (row order inside a group = cg*K + k)
    w_mat = weight.reshape(G, OCg, Cg, K).transpose(0, 2, 1, 3).astype(slab_dtype)
    b_mat = bias.reshape(G, OCg, 1).astype(jnp.float32)

    dims = dict(B=B, C=C, H=H, W=W, OC=OC, K=K, G=G, Cg=Cg, OCg=OCg,
                OH=OH, OW=OW, N=N)
    return (v_lt, v_rt, v_lb, v_rb, fcol, frow, w_mat, b_mat), dims


# ---------------------------------------------------------------------------
# Pallas-backed forward
# ---------------------------------------------------------------------------
def deform_conv2d_pallas(x, offset, weight, bias,
                         stride=(1, 1), padding=(0, 0), dilation=(1, 1), tn=None):
    (v_lt, v_rt, v_lb, v_rb, fcol, frow, w_mat, b_mat), d = _prepare_im2col(
        x, offset, weight, bias, stride, padding, dilation,
        slab_dtype=jnp.bfloat16)
    G, Cg, K, N = v_lt.shape
    OCg = d["OCg"]

    # N tile: kernel is HBM-bandwidth bound, so use a wide lane tile (sweep 512-2048
    # for large problems).  Keep >= 2 total grid steps so v7x's two TensorCores are
    # both used when the problem is small.
    if tn is None:
        tn = 512
        if G * pl.cdiv(N, tn) < 2:
            tn = max(128, _round_up(pl.cdiv(N, 2), 128))
    tn = min(tn, _round_up(N, 128))
    n_tiles = pl.cdiv(N, tn)

    slab_spec = pl.BlockSpec((1, Cg, K, tn), lambda g, n: (g, 0, 0, n))
    frac_spec = pl.BlockSpec((1, K, tn), lambda g, n: (g, 0, n))
    w_spec = pl.BlockSpec((1, Cg, OCg, K), lambda g, n: (g, 0, 0, 0))
    b_spec = pl.BlockSpec((1, OCg, 1), lambda g, n: (g, 0, 0))
    out_spec = pl.BlockSpec((1, OCg, tn), lambda g, n: (g, 0, n))

    out = pl.pallas_call(
        _deform_conv_kernel,
        out_shape=jax.ShapeDtypeStruct((G, OCg, N), jnp.float32),
        grid=(G, n_tiles),
        in_specs=[slab_spec, slab_spec, slab_spec, slab_spec,
                  frac_spec, frac_spec, w_spec, b_spec],
        out_specs=out_spec,
        compiler_params=pltpu.CompilerParams(
            dimension_semantics=("parallel", "parallel"),
            vmem_limit_bytes=64 * 1024 * 1024),
    )(v_lt, v_rt, v_lb, v_rb, fcol, frow, w_mat, b_mat)

    B, OC, OH, OW = d["B"], d["OC"], d["OH"], d["OW"]
    # TODO(synk): low priority -- the NCHW transpose is an extra HBM pass; could be
    #             avoided if the consumer accepts (OC, B, OH, OW).
    out = out.reshape(OC, B, OH, OW).transpose(1, 0, 2, 3)   # -> NCHW
    return out


# Pure-JAX reference (same glue, plain jnp compute) for self-check.
#   slab_dtype=bf16 mirrors the kernel's precision choices (tight tolerance);
#   slab_dtype=f32 is the full-precision reference (loose tolerance, bounds the
#   bf16 rounding the perf review asked for).
def deform_conv2d_ref(x, offset, weight, bias,
                      stride=(1, 1), padding=(0, 0), dilation=(1, 1),
                      slab_dtype=jnp.float32):
    (v_lt, v_rt, v_lb, v_rb, fcol, frow, w_mat, b_mat), d = _prepare_im2col(
        x, offset, weight, bias, stride, padding, dilation, slab_dtype=slab_dtype)
    f32 = jnp.float32
    lt, rt, lb, rb = (v.astype(f32) for v in (v_lt, v_rt, v_lb, v_rb))
    fc = fcol[:, None]                                    # [G,1,K,N]
    fr = frow[:, None]
    top = lt + fc * (rt - lt)
    bot = lb + fc * (rb - lb)
    mapped = (top + fr * (bot - top)).astype(w_mat.dtype)  # [G,Cg,K,N]
    out = jnp.einsum('gcok,gckn->gon', w_mat, mapped,
                     preferred_element_type=jnp.float32) + b_mat
    B, OC, OH, OW = d["B"], d["OC"], d["OH"], d["OW"]
    return out.reshape(OC, B, OH, OW).transpose(1, 0, 2, 3)


# ---------------------------------------------------------------------------
if __name__ == "__main__":
    # Module config: DeformConv2d(in_channels=4, out_channels=8, kernel_size=3,
    #                             stride=1, padding=1, dilation=1, groups=1, bias=True)
    B, C, H, W = 2, 4, 16, 16
    OC, KH, KW = 8, 3, 3
    stride, padding, dilation = (1, 1), (1, 1), (1, 1)
    G = 1
    OH = (H + 2 * padding[0] - (dilation[0] * (KH - 1) + 1)) // stride[0] + 1
    OW = (W + 2 * padding[1] - (dilation[1] * (KW - 1) + 1)) // stride[1] + 1

    key = jax.random.PRNGKey(0)
    kx, koff, kw, kb = jax.random.split(key, 4)

    x = jax.random.normal(kx, (B, C, H, W), dtype=jnp.float32)
    offset = 1.5 * jax.random.normal(koff, (B, 2 * G * KH * KW, OH, OW),
                                     dtype=jnp.float32)

    # deterministic parameter init (kaiming_uniform a=sqrt(5) => U(-1/sqrt(fan_in), ...))
    fan_in = (C // G) * KH * KW
    bound = 1.0 / math.sqrt(fan_in)
    weight = jax.random.uniform(kw, (OC, C // G, KH, KW), jnp.float32, -bound, bound)
    bias = jax.random.uniform(kb, (OC,), jnp.float32, -bound, bound)

    out = deform_conv2d_pallas(x, offset, weight, bias, stride, padding, dilation)
    out = jax.block_until_ready(out)
    assert out.shape == (B, OC, OH, OW), out.shape

    # 1) Kernel vs same-precision (bf16 slabs / bf16 matmul, f32 accumulate) reference:
    #    only accumulation-order differences -> tight tolerance.
    ref_bf16 = jax.block_until_ready(deform_conv2d_ref(
        x, offset, weight, bias, stride, padding, dilation, slab_dtype=jnp.bfloat16))
    assert jnp.allclose(out, ref_bf16, rtol=2e-3, atol=2e-3), \
        float(jnp.max(jnp.abs(out - ref_bf16)))

    # 2) Kernel vs full-f32 reference: bounds the bf16 rounding introduced for
    #    bandwidth / MXU-rate reasons (loosened tolerance as flagged in the review).
    ref_f32 = jax.block_until_ready(deform_conv2d_ref(
        x, offset, weight, bias, stride, padding, dilation, slab_dtype=jnp.float32))
    assert jnp.allclose(out, ref_f32, rtol=5e-2, atol=5e-2), \
        float(jnp.max(jnp.abs(out - ref_f32)))

    print("KERNEL_OK")
</pallas_src>

<mosaic_0001>
module attributes {stable_mosaic.version = 11 : i64} {
  func.func @_deform_conv_kernel(%arg0: i32, %arg1: i32, %arg2: memref<1x4x9x256xbf16, #tpu.memory_space<vmem>>, %arg3: memref<1x4x9x256xbf16, #tpu.memory_space<vmem>>, %arg4: memref<1x4x9x256xbf16, #tpu.memory_space<vmem>>, %arg5: memref<1x4x9x256xbf16, #tpu.memory_space<vmem>>, %arg6: memref<1x9x256xf32, #tpu.memory_space<vmem>>, %arg7: memref<1x9x256xf32, #tpu.memory_space<vmem>>, %arg8: memref<1x4x8x9xbf16, #tpu.memory_space<vmem>>, %arg9: memref<1x8x1xf32, #tpu.memory_space<vmem>>, %arg10: memref<1x8x256xf32, #tpu.memory_space<vmem>>) attributes {dimension_semantics = [#tpu.dimension_semantics<parallel>, #tpu.dimension_semantics<parallel>], iteration_bounds = array<i64: 1, 2>, scalar_prefetch = 0 : i64, scratch_operands = 0 : i64, tpu.core_type = #tpu.core_type<tc>, window_params = [{transform_indices = @transform_0, window_bounds = array<i64: 1, 4, 9, 256>}, {transform_indices = @transform_1, window_bounds = array<i64: 1, 4, 9, 256>}, {transform_indices = @transform_2, window_bounds = array<i64: 1, 4, 9, 256>}, {transform_indices = @transform_3, window_bounds = array<i64: 1, 4, 9, 256>}, {transform_indices = @transform_4, window_bounds = array<i64: 1, 9, 256>}, {transform_indices = @transform_5, window_bounds = array<i64: 1, 9, 256>}, {transform_indices = @transform_6, window_bounds = array<i64: 1, 4, 8, 9>}, {transform_indices = @transform_7, window_bounds = array<i64: 1, 8, 1>}, {transform_indices = @transform_8, window_bounds = array<i64: 1, 8, 256>}]} {
    %c0 = arith.constant 0 : index
    %c0_0 = arith.constant 0 : index
    %c0_1 = arith.constant 0 : index
    %0 = vector.load %arg6[%c0, %c0_0, %c0_1] : memref<1x9x256xf32, #tpu.memory_space<vmem>>, vector<1x9x256xf32>
    %1 = vector.shape_cast %0 : vector<1x9x256xf32> to vector<9x256xf32>
    %c0_2 = arith.constant 0 : index
    %c0_3 = arith.constant 0 : index
    %c0_4 = arith.constant 0 : index
    %2 = vector.load %arg7[%c0_2, %c0_3, %c0_4] : memref<1x9x256xf32, #tpu.memory_space<vmem>>, vector<1x9x256xf32>
    %3 = vector.shape_cast %2 : vector<1x9x256xf32> to vector<9x256xf32>
    %cst = arith.constant 0.000000e+00 : f32
    %4 = vector.broadcast %cst : f32 to vector<8x256xf32>
    %c0_5 = arith.constant 0 : index
    %c0_6 = arith.constant 0 : index
    %c0_7 = arith.constant 0 : index
    %c0_8 = arith.constant 0 : index
    %5 = vector.load %arg2[%c0_5, %c0_6, %c0_7, %c0_8] : memref<1x4x9x256xbf16, #tpu.memory_space<vmem>>, vector<1x1x9x256xbf16>
    %6 = vector.shape_cast %5 : vector<1x1x9x256xbf16> to vector<9x256xbf16>
    %7 = arith.extf %6 : vector<9x256xbf16> to vector<9x256xf32>
    %c0_9 = arith.constant 0 : index
    %c0_10 = arith.constant 0 : index
    %c0_11 = arith.constant 0 : index
    %c0_12 = arith.constant 0 : index
    %8 = vector.load %arg3[%c0_9, %c0_10, %c0_11, %c0_12] : memref<1x4x9x256xbf16, #tpu.memory_space<vmem>>, vector<1x1x9x256xbf16>
    %9 = vector.shape_cast %8 : vector<1x1x9x256xbf16> to vector<9x256xbf16>
    %10 = arith.extf %9 : vector<9x256xbf16> to vector<9x256xf32>
    %c0_13 = arith.constant 0 : index
    %c0_14 = arith.constant 0 : index
    %c0_15 = arith.constant 0 : index
    %c0_16 = arith.constant 0 : index
    %11 = vector.load %arg4[%c0_13, %c0_14, %c0_15, %c0_16] : memref<1x4x9x256xbf16, #tpu.memory_space<vmem>>, vector<1x1x9x256xbf16>
    %12 = vector.shape_cast %11 : vector<1x1x9x256xbf16> to vector<9x256xbf16>
    %13 = arith.extf %12 : vector<9x256xbf16> to vector<9x256xf32>
    %c0_17 = arith.constant 0 : index
    %c0_18 = arith.constant 0 : index
    %c0_19 = arith.constant 0 : index
    %c0_20 = arith.constant 0 : index
    %14 = vector.load %arg5[%c0_17, %c0_18, %c0_19, %c0_20] : memref<1x4x9x256xbf16, #tpu.memory_space<vmem>>, vector<1x1x9x256xbf16>
    %15 = vector.shape_cast %14 : vector<1x1x9x256xbf16> to vector<9x256xbf16>
    %16 = arith.extf %15 : vector<9x256xbf16> to vector<9x256xf32>
    %17 = arith.subf %10, %7 : vector<9x256xf32>
    %18 = arith.mulf %1, %17 : vector<9x256xf32>
    %19 = arith.addf %7, %18 : vector<9x256xf32>
    %20 = arith.subf %16, %13 : vector<9x256xf32>
    %21 = arith.mulf %1, %20 : vector<9x256xf32>
    %22 = arith.addf %13, %21 : vector<9x256xf32>
    %23 = arith.subf %22, %19 : vector<9x256xf32>
    %24 = arith.mulf %3, %23 : vector<9x256xf32>
    %25 = arith.addf %19, %24 : vector<9x256xf32>
    %c0_21 = arith.constant 0 : index
    %c0_22 = arith.constant 0 : index
    %c0_23 = arith.constant 0 : index
    %c0_24 = arith.constant 0 : index
    %26 = vector.load %arg8[%c0_21, %c0_22, %c0_23, %c0_24] : memref<1x4x8x9xbf16, #tpu.memory_space<vmem>>, vector<1x1x8x9xbf16>
    %27 = vector.shape_cast %26 : vector<1x1x8x9xbf16> to vector<8x9xbf16>
    %28 = arith.truncf %25 : vector<9x256xf32> to vector<9x256xbf16>
    %cst_25 = arith.constant dense<0.000000e+00> : vector<8x256xf32>
    %29 = tpu.matmul %27, %28, %cst_25 {dimension_numbers = #tpu.dot_dimension_numbers<[1], [0], [0], [1], [0, 0, 1, 1], [], []>} : vector<8x9xbf16>, vector<9x256xbf16>, vector<8x256xf32> -> vector<8x256xf32>
    %30 = arith.addf %4, %29 : vector<8x256xf32>
    %c0_26 = arith.constant 0 : index
    %c1 = arith.constant 1 : index
    %c0_27 = arith.constant 0 : index
    %c0_28 = arith.constant 0 : index
    %31 = vector.load %arg2[%c0_26, %c1, %c0_27, %c0_28] : memref<1x4x9x256xbf16, #tpu.memory_space<vmem>>, vector<1x1x9x256xbf16>
    %32 = vector.shape_cast %31 : vector<1x1x9x256xbf16> to vector<9x256xbf16>
    %33 = arith.extf %32 : vector<9x256xbf16> to vector<9x256xf32>
    %c0_29 = arith.constant 0 : index
    %c1_30 = arith.constant 1 : index
    %c0_31 = arith.constant 0 : index
    %c0_32 = arith.constant 0 : index
    %34 = vector.load %arg3[%c0_29, %c1_30, %c0_31, %c0_32] : memref<1x4x9x256xbf16, #tpu.memory_space<vmem>>, vector<1x1x9x256xbf16>
    %35 = vector.shape_cast %34 : vector<1x1x9x256xbf16> to vector<9x256xbf16>
    %36 = arith.extf %35 : vector<9x256xbf16> to vector<9x256xf32>
    %c0_33 = arith.constant 0 : index
    %c1_34 = arith.constant 1 : index
    %c0_35 = arith.constant 0 : index
    %c0_36 = arith.constant 0 : index
    %37 = vector.load %arg4[%c0_33, %c1_34, %c0_35, %c0_36] : memref<1x4x9x256xbf16, #tpu.memory_space<vmem>>, vector<1x1x9x256xbf16>
    %38 = vector.shape_cast %37 : vector<1x1x9x256xbf16> to vector<9x256xbf16>
    %39 = arith.extf %38 : vector<9x256xbf16> to vector<9x256xf32>
    %c0_37 = arith.constant 0 : index
    %c1_38 = arith.constant 1 : index
    %c0_39 = arith.constant 0 : index
    %c0_40 = arith.constant 0 : index
    %40 = vector.load %arg5[%c0_37, %c1_38, %c0_39, %c0_40] : memref<1x4x9x256xbf16, #tpu.memory_space<vmem>>, vector<1x1x9x256xbf16>
    %41 = vector.shape_cast %40 : vector<1x1x9x256xbf16> to vector<9x256xbf16>
    %42 = arith.extf %41 : vector<9x256xbf16> to vector<9x256xf32>
    %43 = arith.subf %36, %33 : vector<9x256xf32>
    %44 = arith.mulf %1, %43 : vector<9x256xf32>
    %45 = arith.addf %33, %44 : vector<9x256xf32>
    %46 = arith.subf %42, %39 : vector<9x256xf32>
    %47 = arith.mulf %1, %46 : vector<9x256xf32>
    %48 = arith.addf %39, %47 : vector<9x256xf32>
    %49 = arith.subf %48, %45 : vector<9x256xf32>
    %50 = arith.mulf %3, %49 : vector<9x256xf32>
    %51 = arith.addf %45, %50 : vector<9x256xf32>
    %c0_41 = arith.constant 0 : index
    %c1_42 = arith.constant 1 : index
    %c0_43 = arith.constant 0 : index
    %c0_44 = arith.constant 0 : index
    %52 = vector.load %arg8[%c0_41, %c1_42, %c0_43, %c0_44] : memref<1x4x8x9xbf16, #tpu.memory_space<vmem>>, vector<1x1x8x9xbf16>
    %53 = vector.shape_cast %52 : vector<1x1x8x9xbf16> to vector<8x9xbf16>
    %54 = arith.truncf %51 : vector<9x256xf32> to vector<9x256xbf16>
    %cst_45 = arith.constant dense<0.000000e+00> : vector<8x256xf32>
    %55 = tpu.matmul %53, %54, %cst_45 {dimension_numbers = #tpu.dot_dimension_numbers<[1], [0], [0], [1], [0, 0, 1, 1], [], []>} : vector<8x9xbf16>, vector<9x256xbf16>, vector<8x256xf32> -> vector<8x256xf32>
    %56 = arith.addf %30, %55 : vector<8x256xf32>
    %c0_46 = arith.constant 0 : index
    %c2 = arith.constant 2 : index
    %c0_47 = arith.constant 0 : index
    %c0_48 = arith.constant 0 : index
    %57 = vector.load %arg2[%c0_46, %c2, %c0_47, %c0_48] : memref<1x4x9x256xbf16, #tpu.memory_space<vmem>>, vector<1x1x9x256xbf16>
    %58 = vector.shape_cast %57 : vector<1x1x9x256xbf16> to vector<9x256xbf16>
    %59 = arith.extf %58 : vector<9x256xbf16> to vector<9x256xf32>
    %c0_49 = arith.constant 0 : index
    %c2_50 = arith.constant 2 : index
    %c0_51 = arith.constant 0 : index
    %c0_52 = arith.constant 0 : index
    %60 = vector.load %arg3[%c0_49, %c2_50, %c0_51, %c0_52] : memref<1x4x9x256xbf16, #tpu.memory_space<vmem>>, vector<1x1x9x256xbf16>
    %61 = vector.shape_cast %60 : vector<1x1x9x256xbf16> to vector<9x256xbf16>
    %62 = arith.extf %61 : vector<9x256xbf16> to vector<9x256xf32>
    %c0_53 = arith.constant 0 : index
    %c2_54 = arith.constant 2 : index
    %c0_55 = arith.constant 0 : index
    %c0_56 = arith.constant 0 : index
    %63 = vector.load %arg4[%c0_53, %c2_54, %c0_55, %c0_56] : memref<1x4x9x256xbf16, #tpu.memory_space<vmem>>, vector<1x1x9x256xbf16>
    %64 = vector.shape_cast %63 : vector<1x1x9x256xbf16> to vector<9x256xbf16>
    %65 = arith.extf %64 : vector<9x256xbf16> to vector<9x256xf32>
    %c0_57 = arith.constant 0 : index
    %c2_58 = arith.constant 2 : index
    %c0_59 = arith.constant 0 : index
    %c0_60 = arith.constant 0 : index
    %66 = vector.load %arg5[%c0_57, %c2_58, %c0_59, %c0_60] : memref<1x4x9x256xbf16, #tpu.memory_space<vmem>>, vector<1x1x9x256xbf16>
    %67 = vector.shape_cast %66 : vector<1x1x9x256xbf16> to vector<9x256xbf16>
    %68 = arith.extf %67 : vector<9x256xbf16> to vector<9x256xf32>
    %69 = arith.subf %62, %59 : vector<9x256xf32>
    %70 = arith.mulf %1, %69 : vector<9x256xf32>
    %71 = arith.addf %59, %70 : vector<9x256xf32>
    %72 = arith.subf %68, %65 : vector<9x256xf32>
    %73 = arith.mulf %1, %72 : vector<9x256xf32>
    %74 = arith.addf %65, %73 : vector<9x256xf32>
    %75 = arith.subf %74, %71 : vector<9x256xf32>
    %76 = arith.mulf %3, %75 : vector<9x256xf32>
    %77 = arith.addf %71, %76 : vector<9x256xf32>
    %c0_61 = arith.constant 0 : index
    %c2_62 = arith.constant 2 : index
    %c0_63 = arith.constant 0 : index
    %c0_64 = arith.constant 0 : index
    %78 = vector.load %arg8[%c0_61, %c2_62, %c0_63, %c0_64] : memref<1x4x8x9xbf16, #tpu.memory_space<vmem>>, vector<1x1x8x9xbf16>
    %79 = vector.shape_cast %78 : vector<1x1x8x9xbf16> to vector<8x9xbf16>
    %80 = arith.truncf %77 : vector<9x256xf32> to vector<9x256xbf16>
    %cst_65 = arith.constant dense<0.000000e+00> : vector<8x256xf32>
    %81 = tpu.matmul %79, %80, %cst_65 {dimension_numbers = #tpu.dot_dimension_numbers<[1], [0], [0], [1], [0, 0, 1, 1], [], []>} : vector<8x9xbf16>, vector<9x256xbf16>, vector<8x256xf32> -> vector<8x256xf32>
    %82 = arith.addf %56, %81 : vector<8x256xf32>
    %c0_66 = arith.constant 0 : index
    %c3 = arith.constant 3 : index
    %c0_67 = arith.constant 0 : index
    %c0_68 = arith.constant 0 : index
    %83 = vector.load %arg2[%c0_66, %c3, %c0_67, %c0_68] : memref<1x4x9x256xbf16, #tpu.memory_space<vmem>>, vector<1x1x9x256xbf16>
    %84 = vector.shape_cast %83 : vector<1x1x9x256xbf16> to vector<9x256xbf16>
    %85 = arith.extf %84 : vector<9x256xbf16> to vector<9x256xf32>
    %c0_69 = arith.constant 0 : index
    %c3_70 = arith.constant 3 : index
    %c0_71 = arith.constant 0 : index
    %c0_72 = arith.constant 0 : index
    %86 = vector.load %arg3[%c0_69, %c3_70, %c0_71, %c0_72] : memref<1x4x9x256xbf16, #tpu.memory_space<vmem>>, vector<1x1x9x256xbf16>
    %87 = vector.shape_cast %86 : vector<1x1x9x256xbf16> to vector<9x256xbf16>
    %88 = arith.extf %87 : vector<9x256xbf16> to vector<9x256xf32>
    %c0_73 = arith.constant 0 : index
    %c3_74 = arith.constant 3 : index
    %c0_75 = arith.constant 0 : index
    %c0_76 = arith.constant 0 : index
    %89 = vector.load %arg4[%c0_73, %c3_74, %c0_75, %c0_76] : memref<1x4x9x256xbf16, #tpu.memory_space<vmem>>, vector<1x1x9x256xbf16>
    %90 = vector.shape_cast %89 : vector<1x1x9x256xbf16> to vector<9x256xbf16>
    %91 = arith.extf %90 : vector<9x256xbf16> to vector<9x256xf32>
    %c0_77 = arith.constant 0 : index
    %c3_78 = arith.constant 3 : index
    %c0_79 = arith.constant 0 : index
    %c0_80 = arith.constant 0 : index
    %92 = vector.load %arg5[%c0_77, %c3_78, %c0_79, %c0_80] : memref<1x4x9x256xbf16, #tpu.memory_space<vmem>>, vector<1x1x9x256xbf16>
    %93 = vector.shape_cast %92 : vector<1x1x9x256xbf16> to vector<9x256xbf16>
    %94 = arith.extf %93 : vector<9x256xbf16> to vector<9x256xf32>
    %95 = arith.subf %88, %85 : vector<9x256xf32>
    %96 = arith.mulf %1, %95 : vector<9x256xf32>
    %97 = arith.addf %85, %96 : vector<9x256xf32>
    %98 = arith.subf %94, %91 : vector<9x256xf32>
    %99 = arith.mulf %1, %98 : vector<9x256xf32>
    %100 = arith.addf %91, %99 : vector<9x256xf32>
    %101 = arith.subf %100, %97 : vector<9x256xf32>
    %102 = arith.mulf %3, %101 : vector<9x256xf32>
    %103 = arith.addf %97, %102 : vector<9x256xf32>
    %c0_81 = arith.constant 0 : index
    %c3_82 = arith.constant 3 : index
    %c0_83 = arith.constant 0 : index
    %c0_84 = arith.constant 0 : index
    %104 = vector.load %arg8[%c0_81, %c3_82, %c0_83, %c0_84] : memref<1x4x8x9xbf16, #tpu.memory_space<vmem>>, vector<1x1x8x9xbf16>
    %105 = vector.shape_cast %104 : vector<1x1x8x9xbf16> to vector<8x9xbf16>
    %106 = arith.truncf %103 : vector<9x256xf32> to vector<9x256xbf16>
    %cst_85 = arith.constant dense<0.000000e+00> : vector<8x256xf32>
    %107 = tpu.matmul %105, %106, %cst_85 {dimension_numbers = #tpu.dot_dimension_numbers<[1], [0], [0], [1], [0, 0, 1, 1], [], []>} : vector<8x9xbf16>, vector<9x256xbf16>, vector<8x256xf32> -> vector<8x256xf32>
    %108 = arith.addf %82, %107 : vector<8x256xf32>
    %c0_86 = arith.constant 0 : index
    %c0_87 = arith.constant 0 : index
    %c0_88 = arith.constant 0 : index
    %109 = vector.load %arg9[%c0_86, %c0_87, %c0_88] : memref<1x8x1xf32, #tpu.memory_space<vmem>>, vector<1x8x1xf32>
    %110 = vector.shape_cast %109 : vector<1x8x1xf32> to vector<8x1xf32>
    %111 = vector.broadcast %110 : vector<8x1xf32> to vector<8x256xf32>
    %112 = arith.addf %108, %111 : vector<8x256xf32>
    %c0_89 = arith.constant 0 : index
    %c0_90 = arith.constant 0 : index
    %c0_91 = arith.constant 0 : index
    %113 = vector.load %arg10[%c0_89, %c0_90, %c0_91] : memref<1x8x256xf32, #tpu.memory_space<vmem>>, vector<1x8x256xf32>
    %114 = vector.shape_cast %113 : vector<1x8x256xf32> to vector<8x256xf32>
    %115 = vector.shape_cast %112 : vector<8x256xf32> to vector<1x8x256xf32>
    tpu.vector_store %arg10[%c0_89, %c0_90, %c0_91], %115 {strides = array<i32>} : memref<1x8x256xf32, #tpu.memory_space<vmem>>, vector<1x8x256xf32>,
    return
  }
  func.func @transform_0(%arg0: i32, %arg1: i32) -> (i32, i32, i32, i32) {
    %c0_i32 = arith.constant 0 : i32
    %c0_i32_0 = arith.constant 0 : i32
    %c0_i32_1 = arith.constant 0 : i32
    return %arg0, %c0_i32, %c0_i32_0, %arg1 : i32, i32, i32, i32
  }
  func.func @transform_1(%arg0: i32, %arg1: i32) -> (i32, i32, i32, i32) {
    %c0_i32 = arith.constant 0 : i32
    %c0_i32_0 = arith.constant 0 : i32
    %c0_i32_1 = arith.constant 0 : i32
    return %arg0, %c0_i32, %c0_i32_0, %arg1 : i32, i32, i32, i32
  }
  func.func @transform_2(%arg0: i32, %arg1: i32) -> (i32, i32, i32, i32) {
    %c0_i32 = arith.constant 0 : i32
    %c0_i32_0 = arith.constant 0 : i32
    %c0_i32_1 = arith.constant 0 : i32
    return %arg0, %c0_i32, %c0_i32_0, %arg1 : i32, i32, i32, i32
  }
  func.func @transform_3(%arg0: i32, %arg1: i32) -> (i32, i32, i32, i32) {
    %c0_i32 = arith.constant 0 : i32
    %c0_i32_0 = arith.constant 0 : i32
    %c0_i32_1 = arith.constant 0 : i32
    return %arg0, %c0_i32, %c0_i32_0, %arg1 : i32, i32, i32, i32
  }
  func.func @transform_4(%arg0: i32, %arg1: i32) -> (i32, i32, i32) {
    %c0_i32 = arith.constant 0 : i32
    %c0_i32_0 = arith.constant 0 : i32
    return %arg0, %c0_i32, %arg1 : i32, i32, i32
  }
  func.func @transform_5(%arg0: i32, %arg1: i32) -> (i32, i32, i32) {
    %c0_i32 = arith.constant 0 : i32
    %c0_i32_0 = arith.constant 0 : i32
    return %arg0, %c0_i32, %arg1 : i32, i32, i32
  }
  func.func @transform_6(%arg0: i32, %arg1: i32) -> (i32, i32, i32, i32) {
    %c0_i32 = arith.constant 0 : i32
    %c0_i32_0 = arith.constant 0 : i32
    %c0_i32_1 = arith.constant 0 : i32
    %c0_i32_2 = arith.constant 0 : i32
    return %arg0, %c0_i32, %c0_i32_0, %c0_i32_1 : i32, i32, i32, i32
  }
  func.func @transform_7(%arg0: i32, %arg1: i32) -> (i32, i32, i32) {
    %c0_i32 = arith.constant 0 : i32
    %c0_i32_0 = arith.constant 0 : i32
    %c0_i32_1 = arith.constant 0 : i32
    return %arg0, %c0_i32, %c0_i32_0 : i32, i32, i32
  }
  func.func @transform_8(%arg0: i32, %arg1: i32) -> (i32, i32, i32) {
    %c0_i32 = arith.constant 0 : i32
    %c0_i32_0 = arith.constant 0 : i32
    return %arg0, %c0_i32, %arg1 : i32, i32, i32
  }
}

</mosaic_0001>

<llo_original>
// kernel: tpu_custom_call.1
$region0: #{tpu_custom_call.1}
  #allocation0 [shape = 'u32[]', space=smem, size = 0x4, offset = 0x4, fixed_abs, tag = 'smem constant byte address 0x4 - core index']
  #allocation1 [shape = 'u32[144,128]{1,0:T(1,128)}', space=vmem, size = 0x12000, scoped, tag = 'internal scratch']
  %s0 = inlined_call_operand.hbm [shape: bf16[1,4,9,512], index: 0, kind: input, shape index: {}]
  %s1 = inlined_call_operand.hbm [shape: bf16[1,4,9,512], index: 1, kind: input, shape index: {}]
  %s2 = inlined_call_operand.hbm [shape: bf16[1,4,9,512], index: 2, kind: input, shape index: {}]
  %s3 = inlined_call_operand.hbm [shape: bf16[1,4,9,512], index: 3, kind: input, shape index: {}]
  %s4 = inlined_call_operand.hbm [shape: f32[1,9,512], index: 4, kind: input, shape index: {}]
  %s5 = inlined_call_operand.hbm [shape: f32[1,9,512], index: 5, kind: input, shape index: {}]
  %s6 = inlined_call_operand.hbm [shape: bf16[1,4,8,9], index: 6, kind: input, shape index: {}]
  %s7 = inlined_call_operand.hbm [shape: f32[1,8,1], index: 7, kind: input, shape index: {}]
  %s8 = inlined_call_operand.hbm [shape: f32[1,8,512], index: 8, kind: output, shape index: {}]
  %s9 = sld [smem:[#allocation0]]
  $region97: #{tpu_custom_call.1} parent=0
    _
  %s11 = ssub.s32 1, %s9
  %s12 = scalar_select 0, %s11, %s9
  $region1: #{tpu_custom_call.1} parent=0
    #allocation2 [shape = 'u8[65536]{0}', space=vmem, size = 0x10000, scoped, tag = 'input window, operand 0']
    #allocation3 [shape = 's32[2]{0}', space=sflag, size = 0x8, scoped, tag = 'scoped memory for tpu_custom_call.1']
    #allocation4 [shape = 's32[2]{0}', space=sflag, size = 0x8, scoped, tag = 'scoped memory for tpu_custom_call.1']
    #allocation5 [shape = 'u8[65536]{0}', space=vmem, size = 0x10000, scoped, tag = 'input window, operand 1']
    #allocation6 [shape = 's32[2]{0}', space=sflag, size = 0x8, scoped, tag = 'scoped memory for tpu_custom_call.1']
    #allocation7 [shape = 'u8[65536]{0}', space=vmem, size = 0x10000, scoped, tag = 'input window, operand 2']
    #allocation8 [shape = 'u8[65536]{0}', space=vmem, size = 0x10000, scoped, tag = 'input window, operand 3']
    #allocation9 [shape = 's32[2]{0}', space=sflag, size = 0x8, scoped, tag = 'scoped memory for tpu_custom_call.1']
    #allocation10 [shape = 'u8[32768]{0}', space=vmem, size = 0x8000, scoped, tag = 'input window, operand 4']
    #allocation11 [shape = 'u8[32768]{0}', space=vmem, size = 0x8000, scoped, tag = 'input window, operand 5']
    #allocation12 [shape = 's32[2]{0}', space=sflag, size = 0x8, scoped, tag = 'scoped memory for tpu_custom_call.1']
    #allocation13 [shape = 'u8[8192]{0}', space=vmem, size = 0x2000, scoped, tag = 'input window, operand 6, single buffered']
    #allocation14 [shape = 'u8[4096]{0}', space=vmem, size = 0x1000, scoped, tag = 'input window, operand 7, single buffered']
    #allocation15 [shape = 's32[1]{0}', space=sflag, size = 0x4, scoped, tag = 'scoped memory for tpu_custom_call.1']
    #allocation16 [shape = 'u8[16384]{0}', space=vmem, size = 0x4000, scoped, tag = 'output window, operand 0']
    %13 = vsyncpa [#allocation3], 0
    %s14 = scalar_lea.sflag [#allocation3], 1
    %15 = vsyncpa %s14, 0
    %16 = vsyncpa [#allocation6], 0
    %s17 = scalar_lea.sflag [#allocation6], 1
    %18 = vsyncpa %s17, 0
    %19 = vsyncpa [#allocation9], 0
    %s20 = scalar_lea.sflag [#allocation9], 1
    %21 = vsyncpa %s20, 0
    %22 = vsyncpa [#allocation12], 0
    %s23 = scalar_lea.sflag [#allocation12], 1
    %24 = vsyncpa %s23, 0
    %25 = vsyncpa [#allocation15], 0
    %26 = vsyncpa [#allocation4], 0
    %s27 = scalar_lea.sflag [#allocation4], 1
    %28 = vsyncpa %s27, 0
    loop: start=0, step=1, limit=4
    $region2: #{tpu_custom_call.1} parent=1 // loop_pre_header
      _
    $region3: #{tpu_custom_call.1} parent=1 // loop_header
      %s30 = sphi 0, %s34
      %p31 = scmp.ge.s32.totalorder %s30, 4
      %s37 = sphi 0, %s49
      %s38 = sphi 0, %s45
      %s39 = sphi 0, %s37
      %s40 = sphi 0, %s38
      %s41 = sphi 0, %s39
      %s42 = sphi 0, %s40
      %s54 = sphi 0, %s56
      %s57 = sphi 0, %s54
      %s58 = sphi 0, %s57
      %s74 = sphi 0, %s58
      %s82 = sphi 0, %s84
      %s85 = sphi 0, %s82
      %s86 = sphi 0, %s85
      %s102 = sphi 0, %s86
      %s110 = sphi 0, %s112
      %s113 = sphi 0, %s110
      %s114 = sphi 0, %s113
      %s130 = sphi 0, %s114
      %s138 = sphi 0, %s140
      %s141 = sphi 0, %s138
      %s142 = sphi 0, %s141
      %s158 = sphi 0, %s142
      %s166 = sphi 0, %s168
      %s169 = sphi 0, %s166
      %s170 = sphi 0, %s169
      %s186 = sphi 0, %s170
      %s194 = sphi 0, %s196
      %s197 = sphi 0, %s194
      %s198 = sphi 0, %s197
      %s214 = sphi 0, %s198
      %s220 = sphi 0, %s222
      %s223 = sphi 0, %s220
      %s224 = sphi 0, %s223
      %s240 = sphi 0, %s224
      %s246 = sphi 0, %s248
      %s249 = sphi 0, %s246
      %s250 = sphi 0, %s249
      %s266 = sphi 0, %s250
      %s274 = sphi 0, %s276
      %s277 = sphi 0, %s274
      %s278 = sphi 0, %s277
      %s294 = sphi 0, %s278
    $region4: #{tpu_custom_call.1} parent=1 // loop_header_branch
      %33 = sbr.rel (%p31) target = $region8
    $region5: #{tpu_custom_call.1} parent=1 // loop_body
      %s35 = ssub.s32 %s30, 1
      %s36 = ssub.s32 %s30, 2
      %s43 = sadd.s32 1, %s38
      %p44 = scmp.ge.s32.totalorder %s43, 2
      %s45 = scalar_select %p44, 0, %s43
      %s46 = sadd.s32 1, %s37
      %s47 = scalar_select %p44, %s46, %s37
      %p48 = scmp.ge.s32.totalorder %s47, 1
      %s49 = scalar_select %p48, 0, %s47
      %s50 = ssub.s32 %s37, %s49
      %s51 = ssub.s32 %s38, %s45
      %s52 = sor.u32 %s50, %s51
      %p53 = scmp.eq.s32.totalorder %s52, 0
      %s55 = sadd.s32 %s54, 1
      %s56 = scalar_select %p53, %s54, %s55
      %p59 = pneg %p53
      %p60 = scmp.eq.s32.totalorder %s30, 1
      %p61 = por %p59, %p60
      %p62 = scmp.ne.s32.totalorder %s54, %s57
      %p63 = scmp.eq.s32.totalorder %s30, 0
      %p64 = por %p62, %p63
      %p65 = scmp.ne.s32.totalorder %s54, %s57
      %p66 = scmp.eq.s32.totalorder %s35, 1
      %p67 = por %p65, %p66
      %p68 = scmp.ne.s32.totalorder %s57, %s58
      %p69 = scmp.eq.s32.totalorder %s35, 0
      %p70 = por %p68, %p69
      %p71 = scmp.ne.s32.totalorder %s57, %s58
      %p72 = scmp.eq.s32.totalorder %s36, 1
      %p73 = por %p71, %p72
      %p75 = scmp.ne.s32.totalorder %s58, %s74
      %p76 = scmp.eq.s32.totalorder %s36, 0
      %p77 = por %p75, %p76
      %s78 = ssub.s32 %s37, %s49
      %s79 = ssub.s32 %s38, %s45
      %s80 = sor.u32 %s78, %s79
      %p81 = scmp.eq.s32.totalorder %s80, 0
      %s83 = sadd.s32 %s82, 1
      %s84 = scalar_select %p81, %s82, %s83
      %p87 = pneg %p81
      %p88 = scmp.eq.s32.totalorder %s30, 1
      %p89 = por %p87, %p88
      %p90 = scmp.ne.s32.totalorder %s82, %s85
      %p91 = scmp.eq.s32.totalorder %s30, 0
      %p92 = por %p90, %p91
      %p93 = scmp.ne.s32.totalorder %s82, %s85
      %p94 = scmp.eq.s32.totalorder %s35, 1
      %p95 = por %p93, %p94
      %p96 = scmp.ne.s32.totalorder %s85, %s86
      %p97 = scmp.eq.s32.totalorder %s35, 0
      %p98 = por %p96, %p97
      %p99 = scmp.ne.s32.totalorder %s85, %s86
      %p100 = scmp.eq.s32.totalorder %s36, 1
      %p101 = por %p99, %p100
      %p103 = scmp.ne.s32.totalorder %s86, %s102
      %p104 = scmp.eq.s32.totalorder %s36, 0
      %p105 = por %p103, %p104
      %s106 = ssub.s32 %s37, %s49
      %s107 = ssub.s32 %s38, %s45
      %s108 = sor.u32 %s106, %s107
      %p109 = scmp.eq.s32.totalorder %s108, 0
      %s111 = sadd.s32 %s110, 1
      %s112 = scalar_select %p109, %s110, %s111
      %p115 = pneg %p109
      %p116 = scmp.eq.s32.totalorder %s30, 1
      %p117 = por %p115, %p116
      %p118 = scmp.ne.s32.totalorder %s110, %s113
      %p119 = scmp.eq.s32.totalorder %s30, 0
      %p120 = por %p118, %p119
      %p121 = scmp.ne.s32.totalorder %s110, %s113
      %p122 = scmp.eq.s32.totalorder %s35, 1
      %p123 = por %p121, %p122
      %p124 = scmp.ne.s32.totalorder %s113, %s114
      %p125 = scmp.eq.s32.totalorder %s35, 0
      %p126 = por %p124, %p125
      %p127 = scmp.ne.s32.totalorder %s113, %s114
      %p128 = scmp.eq.s32.totalorder %s36, 1
      %p129 = por %p127, %p128
      %p131 = scmp.ne.s32.totalorder %s114, %s130
      %p132 = scmp.eq.s32.totalorder %s36, 0
      %p133 = por %p131, %p132
      %s134 = ssub.s32 %s37, %s49
      %s135 = ssub.s32 %s38, %s45
      %s136 = sor.u32 %s134, %s135
      %p137 = scmp.eq.s32.totalorder %s136, 0
      %s139 = sadd.s32 %s138, 1
      %s140 = scalar_select %p137, %s138, %s139
      %p143 = pneg %p137
      %p144 = scmp.eq.s32.totalorder %s30, 1
      %p145 = por %p143, %p144
      %p146 = scmp.ne.s32.totalorder %s138, %s141
      %p147 = scmp.eq.s32.totalorder %s30, 0
      %p148 = por %p146, %p147
      %p149 = scmp.ne.s32.totalorder %s138, %s141
      %p150 = scmp.eq.s32.totalorder %s35, 1
      %p151 = por %p149, %p150
      %p152 = scmp.ne.s32.totalorder %s141, %s142
      %p153 = scmp.eq.s32.totalorder %s35, 0
      %p154 = por %p152, %p153
      %p155 = scmp.ne.s32.totalorder %s141, %s142
      %p156 = scmp.eq.s32.totalorder %s36, 1
      %p157 = por %p155, %p156
      %p159 = scmp.ne.s32.totalorder %s142, %s158
      %p160 = scmp.eq.s32.totalorder %s36, 0
      %p161 = por %p159, %p160
      %s162 = ssub.s32 %s37, %s49
      %s163 = ssub.s32 %s38, %s45
      %s164 = sor.u32 %s162, %s163
      %p165 = scmp.eq.s32.totalorder %s164, 0
      %s167 = sadd.s32 %s166, 1
      %s168 = scalar_select %p165, %s166, %s167
      %p171 = pneg %p165
      %p172 = scmp.eq.s32.totalorder %s30, 1
      %p173 = por %p171, %p172
      %p174 = scmp.ne.s32.totalorder %s166, %s169
      %p175 = scmp.eq.s32.totalorder %s30, 0
      %p176 = por %p174, %p175
      %p177 = scmp.ne.s32.totalorder %s166, %s169
      %p178 = scmp.eq.s32.totalorder %s35, 1
      %p179 = por %p177, %p178
      %p180 = scmp.ne.s32.totalorder %s169, %s170
      %p181 = scmp.eq.s32.totalorder %s35, 0
      %p182 = por %p180, %p181
      %p183 = scmp.ne.s32.totalorder %s169, %s170
      %p184 = scmp.eq.s32.totalorder %s36, 1
      %p185 = por %p183, %p184
      %p187 = scmp.ne.s32.totalorder %s170, %s186
      %p188 = scmp.eq.s32.totalorder %s36, 0
      %p189 = por %p187, %p188
      %s190 = ssub.s32 %s37, %s49
      %s191 = ssub.s32 %s38, %s45
      %s192 = sor.u32 %s190, %s191
      %p193 = scmp.eq.s32.totalorder %s192, 0
      %s195 = sadd.s32 %s194, 1
      %s196 = scalar_select %p193, %s194, %s195
      %p199 = pneg %p193
      %p200 = scmp.eq.s32.totalorder %s30, 1
      %p201 = por %p199, %p200
      %p202 = scmp.ne.s32.totalorder %s194, %s197
      %p203 = scmp.eq.s32.totalorder %s30, 0
      %p204 = por %p202, %p203
      %p205 = scmp.ne.s32.totalorder %s194, %s197
      %p206 = scmp.eq.s32.totalorder %s35, 1
      %p207 = por %p205, %p206
      %p208 = scmp.ne.s32.totalorder %s197, %s198
      %p209 = scmp.eq.s32.totalorder %s35, 0
      %p210 = por %p208, %p209
      %p211 = scmp.ne.s32.totalorder %s197, %s198
      %p212 = scmp.eq.s32.totalorder %s36, 1
      %p213 = por %p211, %p212
      %p215 = scmp.ne.s32.totalorder %s198, %s214
      %p216 = scmp.eq.s32.totalorder %s36, 0
      %p217 = por %p215, %p216
      %s218 = ssub.s32 %s37, %s49
      %p219 = scmp.eq.s32.totalorder %s218, 0
      %s221 = sadd.s32 %s220, 1
      %s222 = scalar_select %p219, %s220, %s221
      %p225 = pneg %p219
      %p226 = scmp.eq.s32.totalorder %s30, 1
      %p227 = por %p225, %p226
      %p228 = scmp.ne.s32.totalorder %s220, %s223
      %p229 = scmp.eq.s32.totalorder %s30, 0
      %p230 = por %p228, %p229
      %p231 = scmp.ne.s32.totalorder %s220, %s223
      %p232 = scmp.eq.s32.totalorder %s35, 1
      %p233 = por %p231, %p232
      %p234 = scmp.ne.s32.totalorder %s223, %s224
      %p235 = scmp.eq.s32.totalorder %s35, 0
      %p236 = por %p234, %p235
      %p237 = scmp.ne.s32.totalorder %s223, %s224
      %p238 = scmp.eq.s32.totalorder %s36, 1
      %p239 = por %p237, %p238
      %p241 = scmp.ne.s32.totalorder %s224, %s240
      %p242 = scmp.eq.s32.totalorder %s36, 0
      %p243 = por %p241, %p242
      %s244 = ssub.s32 %s37, %s49
      %p245 = scmp.eq.s32.totalorder %s244, 0
      %s247 = sadd.s32 %s246, 1
      %s248 = scalar_select %p245, %s246, %s247
      %p251 = pneg %p245
      %p252 = scmp.eq.s32.totalorder %s30, 1
      %p253 = por %p251, %p252
      %p254 = scmp.ne.s32.totalorder %s246, %s249
      %p255 = scmp.eq.s32.totalorder %s30, 0
      %p256 = por %p254, %p255
      %p257 = scmp.ne.s32.totalorder %s246, %s249
      %p258 = scmp.eq.s32.totalorder %s35, 1
      %p259 = por %p257, %p258
      %p260 = scmp.ne.s32.totalorder %s249, %s250
      %p261 = scmp.eq.s32.totalorder %s35, 0
      %p262 = por %p260, %p261
      %p263 = scmp.ne.s32.totalorder %s249, %s250
      %p264 = scmp.eq.s32.totalorder %s36, 1
      %p265 = por %p263, %p264
      %p267 = scmp.ne.s32.totalorder %s250, %s266
      %p268 = scmp.eq.s32.totalorder %s36, 0
      %p269 = por %p267, %p268
      %s270 = ssub.s32 %s37, %s49
      %s271 = ssub.s32 %s38, %s45
      %s272 = sor.u32 %s270, %s271
      %p273 = scmp.eq.s32.totalorder %s272, 0
      %s275 = sadd.s32 %s274, 1
      %s276 = scalar_select %p273, %s274, %s275
      %p279 = pneg %p273
      %p280 = scmp.eq.s32.totalorder %s30, 1
      %p281 = por %p279, %p280
      %p282 = scmp.ne.s32.totalorder %s274, %s277
      %p283 = scmp.eq.s32.totalorder %s30, 0
      %p284 = por %p282, %p283
      %p285 = scmp.ne.s32.totalorder %s274, %s277
      %p286 = scmp.eq.s32.totalorder %s35, 1
      %p287 = por %p285, %p286
      %p288 = scmp.ne.s32.totalorder %s277, %s278
      %p289 = scmp.eq.s32.totalorder %s35, 0
      %p290 = por %p288, %p289
      %p291 = scmp.ne.s32.totalorder %s277, %s278
      %p292 = scmp.eq.s32.totalorder %s36, 1
      %p293 = por %p291, %p292
      %p295 = scmp.ne.s32.totalorder %s278, %s294
      %p296 = scmp.eq.s32.totalorder %s36, 0
      %p297 = por %p295, %p296
      %p298 = scmp.le.s32.totalorder 1, %s30
      %p299 = scmp.lt.s32.totalorder %s30, 3
      %p300 = pnand %p298, %p299
      %p301 = pneg %p300
      // Predicated region
      $region9: #{tpu_custom_call.1} parent=5 // pred_check
        _
      $region10: #{tpu_custom_call.1} parent=5 // pred_check_branch
        %303 = sbr.rel (%p300) target = $region12
      $region11: #{tpu_custom_call.1} parent=5 // pred_region
        %s304 = ssub.s32 %s30, 1
        // Predicated region
        $region13: #{tpu_custom_call.1} parent=11 // pred_check
          %p305 = pneg %p236
        $region14: #{tpu_custom_call.1} parent=11 // pred_check_branch
          %307 = sbr.rel (%p305) target = $region16
        $region15: #{tpu_custom_call.1} parent=11 // pred_region
          %s309 = ssub.s32 256, 256
          %310 = vsyncadd [#allocation12], %s309
          %s311 = smul.addr %s39, 4
          %s312 = smul.addr %s311, 64
          %s313 = scalar_lea.hbm %s6, %s312
          %s314 = sshll.u32 [#allocation13], 4
          %s315 = int_to_ptr.vmem [resolvable:$true] %s314
          %320 = dma.hbm_to_vmem [thread:$0]  %s313, 256, %s315, [#allocation12], 64, 64, 4
        $region16: #{tpu_custom_call.1} parent=11 // pred_fallthru
          _
        // Predicated region
        $region17: #{tpu_custom_call.1} parent=11 // pred_check
          %p321 = pneg %p262
        $region18: #{tpu_custom_call.1} parent=11 // pred_check_branch
          %323 = sbr.rel (%p321) target = $region20
        $region19: #{tpu_custom_call.1} parent=11 // pred_region
          %s325 = ssub.s32 128, 128
          %326 = vsyncadd [#allocation15], %s325
          %s327 = smul.addr %s39, 128
          %s328 = scalar_lea.hbm %s7, %s327
          %s330 = sshll.u32 [#allocation14], 4
          %s331 = int_to_ptr.vmem [resolvable:$true] %s330
          %333 = dma.hbm_to_vmem [thread:$0]  %s328, 128, %s331, [#allocation15]
        $region20: #{tpu_custom_call.1} parent=11 // pred_fallthru
          _
      $region12: #{tpu_custom_call.1} parent=5 // pred_fallthru
        _
      %p334 = scmp.lt.s32.totalorder %s30, 2
      // Predicated region
      $region21: #{tpu_custom_call.1} parent=5 // pred_check
        %p335 = pneg %p334
      $region22: #{tpu_custom_call.1} parent=5 // pred_check_branch
        %337 = sbr.rel (%p335) target = $region24
      $region23: #{tpu_custom_call.1} parent=5 // pred_region
        // Predicated region
        $region25: #{tpu_custom_call.1} parent=23 // pred_check
          %p338 = pneg %p64
        $region26: #{tpu_custom_call.1} parent=23 // pred_check_branch
          %340 = sbr.rel (%p338) target = $region28
        $region27: #{tpu_custom_call.1} parent=23 // pred_region
          %s341 = sand.u32 %s54, 1
          %s342 = scalar_lea.sflag [#allocation3], %s341
          %s343 = sand.u32 %s54, 1
          %s344 = smul.addr %s343, 64
          %s345 = scalar_lea.vmem [#allocation2], %s344
          %s346 = smul.u32 2, %s38
          %s348 = ssub.s32 1024, 1024
          %349 = vsyncadd %s342, %s348
          %s350 = smul.addr %s37, 32
          %s351 = sadd.s32 %s346, %s350
          %s352 = smul.addr %s351, 64
          %s353 = scalar_lea.hbm %s0, %s352
          %s354 = sshll.u32 %s345, 4
          %s355 = int_to_ptr.vmem [resolvable:$true] %s354
          %360 = dma.hbm_to_vmem [thread:$0]  %s353, 1024, %s355, %s342, 256, 128, 8
        $region28: #{tpu_custom_call.1} parent=23 // pred_fallthru
          _
        // Predicated region
        $region29: #{tpu_custom_call.1} parent=23 // pred_check
          %p361 = pneg %p92
        $region30: #{tpu_custom_call.1} parent=23 // pred_check_branch
          %363 = sbr.rel (%p361) target = $region32
        $region31: #{tpu_custom_call.1} parent=23 // pred_region
          %s364 = sand.u32 %s30, 1
          %s365 = scalar_lea.sflag [#allocation6], %s364
          %s366 = sand.u32 %s82, 1
          %s367 = smul.addr %s366, 64
          %s368 = scalar_lea.vmem [#allocation5], %s367
          %s369 = smul.u32 2, %s38
          %s371 = ssub.s32 1024, 1024
          %372 = vsyncadd %s365, %s371
          %s373 = smul.addr %s37, 32
          %s374 = sadd.s32 %s369, %s373
          %s375 = smul.addr %s374, 64
          %s376 = scalar_lea.hbm %s1, %s375
          %s377 = sshll.u32 %s368, 4
          %s378 = int_to_ptr.vmem [resolvable:$true] %s377
          %383 = dma.hbm_to_vmem [thread:$0]  %s376, 1024, %s378, %s365, 256, 128, 8
        $region32: #{tpu_custom_call.1} parent=23 // pred_fallthru
          _
        // Predicated region
        $region33: #{tpu_custom_call.1} parent=23 // pred_check
          %p384 = pneg %p120
        $region34: #{tpu_custom_call.1} parent=23 // pred_check_branch
          %386 = sbr.rel (%p384) target = $region36
        $region35: #{tpu_custom_call.1} parent=23 // pred_region
          %s387 = sand.u32 %s30, 1
          %s388 = scalar_lea.sflag [#allocation6], %s387
          %s389 = sand.u32 %s110, 1
          %s390 = smul.addr %s389, 64
          %s391 = scalar_lea.vmem [#allocation7], %s390
          %s392 = smul.u32 2, %s38
          %s394 = ssub.s32 1024, 1024
          %395 = vsyncadd %s388, %s394
          %s396 = smul.addr %s37, 32
          %s397 = sadd.s32 %s392, %s396
          %s398 = smul.addr %s397, 64
          %s399 = scalar_lea.hbm %s2, %s398
          %s400 = sshll.u32 %s391, 4
          %s401 = int_to_ptr.vmem [resolvable:$true] %s400
          %406 = dma.hbm_to_vmem [thread:$0]  %s399, 1024, %s401, %s388, 256, 128, 8
        $region36: #{tpu_custom_call.1} parent=23 // pred_fallthru
          _
        // Predicated region
        $region37: #{tpu_custom_call.1} parent=23 // pred_check
          %p407 = pneg %p148
        $region38: #{tpu_custom_call.1} parent=23 // pred_check_branch
          %409 = sbr.rel (%p407) target = $region40
        $region39: #{tpu_custom_call.1} parent=23 // pred_region
          %s410 = sand.u32 %s30, 1
          %s411 = scalar_lea.sflag [#allocation9], %s410
          %s412 = sand.u32 %s138, 1
          %s413 = smul.addr %s412, 64
          %s414 = scalar_lea.vmem [#allocation8], %s413
          %s415 = smul.u32 2, %s38
          %s417 = ssub.s32 1024, 1024
          %418 = vsyncadd %s411, %s417
          %s419 = smul.addr %s37, 32
          %s420 = sadd.s32 %s415, %s419
          %s421 = smul.addr %s420, 64
          %s422 = scalar_lea.hbm %s3, %s421
          %s423 = sshll.u32 %s414, 4
          %s424 = int_to_ptr.vmem [resolvable:$true] %s423
          %429 = dma.hbm_to_vmem [thread:$0]  %s422, 1024, %s424, %s411, 256, 128, 8
        $region40: #{tpu_custom_call.1} parent=23 // pred_fallthru
          _
        // Predicated region
        $region41: #{tpu_custom_call.1} parent=23 // pred_check
          %p430 = pneg %p176
        $region42: #{tpu_custom_call.1} parent=23 // pred_check_branch
          %432 = sbr.rel (%p430) target = $region44
        $region43: #{tpu_custom_call.1} parent=23 // pred_region
          %s433 = sand.u32 %s30, 1
          %s434 = scalar_lea.sflag [#allocation9], %s433
          %s435 = sand.u32 %s166, 1
          %s436 = smul.addr %s435, 32
          %s437 = scalar_lea.vmem [#allocation10], %s436
          %s438 = smul.u32 2, %s38
          %s440 = ssub.s32 512, 512
          %441 = vsyncadd %s434, %s440
          %s442 = smul.addr %s37, 8
          %s443 = sadd.s32 %s438, %s442
          %s444 = smul.addr %s443, 128
          %s445 = scalar_lea.hbm %s4, %s444
          %s446 = sshll.u32 %s437, 4
          %s447 = int_to_ptr.vmem [resolvable:$true] %s446
          %452 = dma.hbm_to_vmem [thread:$0]  %s445, 512, %s447, %s434, 512, 256, 16
        $region44: #{tpu_custom_call.1} parent=23 // pred_fallthru
          _
        // Predicated region
        $region45: #{tpu_custom_call.1} parent=23 // pred_check
          %p453 = pneg %p204
        $region46: #{tpu_custom_call.1} parent=23 // pred_check_branch
          %455 = sbr.rel (%p453) target = $region48
        $region47: #{tpu_custom_call.1} parent=23 // pred_region
          %s456 = sand.u32 %s30, 1
          %s457 = scalar_lea.sflag [#allocation12], %s456
          %s458 = sand.u32 %s194, 1
          %s459 = smul.addr %s458, 32
          %s460 = scalar_lea.vmem [#allocation11], %s459
          %s461 = smul.u32 2, %s38
          %s463 = ssub.s32 512, 512
          %464 = vsyncadd %s457, %s463
          %s465 = smul.addr %s37, 8
          %s466 = sadd.s32 %s461, %s465
          %s467 = smul.addr %s466, 128
          %s468 = scalar_lea.hbm %s5, %s467
          %s469 = sshll.u32 %s460, 4
          %s470 = int_to_ptr.vmem [resolvable:$true] %s469
          %475 = dma.hbm_to_vmem [thread:$0]  %s468, 512, %s470, %s457, 512, 256, 16
        $region48: #{tpu_custom_call.1} parent=23 // pred_fallthru
          _
      $region24: #{tpu_custom_call.1} parent=5 // pred_fallthru
        _
      %p476 = scmp.le.s32.totalorder 1, %s30
      %p477 = scmp.lt.s32.totalorder %s30, 3
      %p478 = pnand %p476, %p477
      %p479 = pneg %p478
      // Predicated region
      $region49: #{tpu_custom_call.1} parent=5 // pred_check
        _
      $region50: #{tpu_custom_call.1} parent=5 // pred_check_branch
        %481 = sbr.rel (%p478) target = $region52
      $region51: #{tpu_custom_call.1} parent=5 // pred_region
        %s482 = ssub.s32 %s30, 1
        %s483 = sand.u32 %s57, 1
        %s484 = scalar_lea.sflag [#allocation3], %s483
        %s485 = sand.u32 %s57, 1
        %s486 = smul.addr %s485, 64
        %s487 = scalar_lea.vmem [#allocation2], %s486
        // Predicated region
        $region53: #{tpu_custom_call.1} parent=51 // pred_check
          %p488 = pneg %p70
        $region54: #{tpu_custom_call.1} parent=51 // pred_check_branch
          %490 = sbr.rel (%p488) target = $region56
        $region55: #{tpu_custom_call.1} parent=51 // pred_region
          %491 = dma.done %s484, 1024
        $region56: #{tpu_custom_call.1} parent=51 // pred_fallthru
          _
        %s492 = sand.u32 %s35, 1
        %s493 = scalar_lea.sflag [#allocation6], %s492
        %s494 = sand.u32 %s85, 1
        %s495 = smul.addr %s494, 64
        %s496 = scalar_lea.vmem [#allocation5], %s495
        // Predicated region
        $region57: #{tpu_custom_call.1} parent=51 // pred_check
          %p497 = pneg %p98
        $region58: #{tpu_custom_call.1} parent=51 // pred_check_branch
          %499 = sbr.rel (%p497) target = $region60
        $region59: #{tpu_custom_call.1} parent=51 // pred_region
          %500 = dma.done %s493, 1024
        $region60: #{tpu_custom_call.1} parent=51 // pred_fallthru
          _
        %s501 = sand.u32 %s35, 1
        %s502 = scalar_lea.sflag [#allocation6], %s501
        %s503 = sand.u32 %s113, 1
        %s504 = smul.addr %s503, 64
        %s505 = scalar_lea.vmem [#allocation7], %s504
        // Predicated region
        $region61: #{tpu_custom_call.1} parent=51 // pred_check
          %p506 = pneg %p126
        $region62: #{tpu_custom_call.1} parent=51 // pred_check_branch
          %508 = sbr.rel (%p506) target = $region64
        $region63: #{tpu_custom_call.1} parent=51 // pred_region
          %509 = dma.done %s502, 1024
        $region64: #{tpu_custom_call.1} parent=51 // pred_fallthru
          _
        %s510 = sand.u32 %s35, 1
        %s511 = scalar_lea.sflag [#allocation9], %s510
        %s512 = sand.u32 %s141, 1
        %s513 = smul.addr %s512, 64
        %s514 = scalar_lea.vmem [#allocation8], %s513
        // Predicated region
        $region65: #{tpu_custom_call.1} parent=51 // pred_check
          %p515 = pneg %p154
        $region66: #{tpu_custom_call.1} parent=51 // pred_check_branch
          %517 = sbr.rel (%p515) target = $region68
        $region67: #{tpu_custom_call.1} parent=51 // pred_region
          %518 = dma.done %s511, 1024
        $region68: #{tpu_custom_call.1} parent=51 // pred_fallthru
          _
        %s519 = sand.u32 %s35, 1
        %s520 = scalar_lea.sflag [#allocation9], %s519
        %s521 = sand.u32 %s169, 1
        %s522 = smul.addr %s521, 32
        %s523 = scalar_lea.vmem [#allocation10], %s522
        // Predicated region
        $region69: #{tpu_custom_call.1} parent=51 // pred_check
          %p524 = pneg %p182
        $region70: #{tpu_custom_call.1} parent=51 // pred_check_branch
          %526 = sbr.rel (%p524) target = $region72
        $region71: #{tpu_custom_call.1} parent=51 // pred_region
          %527 = dma.done %s520, 512
        $region72: #{tpu_custom_call.1} parent=51 // pred_fallthru
          _
        %s528 = sand.u32 %s35, 1
        %s529 = scalar_lea.sflag [#allocation12], %s528
        %s530 = sand.u32 %s197, 1
        %s531 = smul.addr %s530, 32
        %s532 = scalar_lea.vmem [#allocation11], %s531
        // Predicated region
        $region73: #{tpu_custom_call.1} parent=51 // pred_check
          %p533 = pneg %p210
        $region74: #{tpu_custom_call.1} parent=51 // pred_check_branch
          %535 = sbr.rel (%p533) target = $region76
        $region75: #{tpu_custom_call.1} parent=51 // pred_region
          %536 = dma.done %s529, 512
        $region76: #{tpu_custom_call.1} parent=51 // pred_fallthru
          _
        // Predicated region
        $region77: #{tpu_custom_call.1} parent=51 // pred_check
          %p537 = pneg %p236
        $region78: #{tpu_custom_call.1} parent=51 // pred_check_branch
          %539 = sbr.rel (%p537) target = $region80
        $region79: #{tpu_custom_call.1} parent=51 // pred_region
          %540 = dma.done [#allocation12], 256
        $region80: #{tpu_custom_call.1} parent=51 // pred_fallthru
          _
        // Predicated region
        $region81: #{tpu_custom_call.1} parent=51 // pred_check
          %p541 = pneg %p262
        $region82: #{tpu_custom_call.1} parent=51 // pred_check_branch
          %543 = sbr.rel (%p541) target = $region84
        $region83: #{tpu_custom_call.1} parent=51 // pred_region
          %544 = dma.done [#allocation15], 128
        $region84: #{tpu_custom_call.1} parent=51 // pred_fallthru
          _
        %s545 = sand.u32 %s57, 1
        %s546 = scalar_lea.sflag [#allocation3], %s545
        %s547 = sand.u32 %s57, 1
        %s548 = smul.addr %s547, 64
        %s549 = scalar_lea.vmem [#allocation2], %s548
        %p550 = pneg %p70
        %p551 = pneg %p67
        %s552 = sand.u32 %s35, 1
        %s553 = scalar_lea.sflag [#allocation6], %s552
        %s554 = sand.u32 %s85, 1
        %s555 = smul.addr %s554, 64
        %s556 = scalar_lea.vmem [#allocation5], %s555
        %p557 = pneg %p98
        %p558 = pneg %p95
        %s559 = sand.u32 %s35, 1
        %s560 = scalar_lea.sflag [#allocation6], %s559
        %s561 = sand.u32 %s113, 1
        %s562 = smul.addr %s561, 64
        %s563 = scalar_lea.vmem [#allocation7], %s562
        %p564 = pneg %p126
        %p565 = pneg %p123
        %s566 = sand.u32 %s35, 1
        %s567 = scalar_lea.sflag [#allocation9], %s566
        %s568 = sand.u32 %s141, 1
        %s569 = smul.addr %s568, 64
        %s570 = scalar_lea.vmem [#allocation8], %s569
        %p571 = pneg %p154
        %p572 = pneg %p151
        %s573 = sand.u32 %s35, 1
        %s574 = scalar_lea.sflag [#allocation9], %s573
        %s575 = sand.u32 %s169, 1
        %s576 = smul.addr %s575, 32
        %s577 = scalar_lea.vmem [#allocation10], %s576
        %p578 = pneg %p182
        %p579 = pneg %p179
        %s580 = sand.u32 %s35, 1
        %s581 = scalar_lea.sflag [#allocation12], %s580
        %s582 = sand.u32 %s197, 1
        %s583 = smul.addr %s582, 32
        %s584 = scalar_lea.vmem [#allocation11], %s583
        %p585 = pneg %p210
        %p586 = pneg %p207
        %p587 = pneg %p236
        %p588 = pneg %p233
        %p589 = pneg %p262
        %p590 = pneg %p259
        %p591 = pneg %p290
        %p592 = pneg %p287
        %s593 = sand.u32 %s277, 1
        %s594 = scalar_lea.sflag [#allocation4], %s593
        %s595 = sand.u32 %s277, 1
        %s596 = smul.addr %s595, 16
        %s597 = scalar_lea.vmem [#allocation16], %s596
        %s598 = smul.u32 2, %s40
        %s599 = smul.u32 2, %s40
        %s600 = smul.u32 2, %s40
        %s601 = smul.u32 2, %s40
        %s602 = smul.u32 2, %s40
        %s603 = smul.u32 2, %s40
        %s604 = smul.u32 2, %s40
        %v606 = vld [vmem:[%s523] sm:$0xff]
        %v607 = vld [vmem:[%s523 + $0x8] sm:$0xff]
        %v608 = vld [vmem:[%s523 + $0x10] sm:$0x1]
        %v609 = vld [vmem:[%s523 + $0x18] sm:$0x1]
        %v610 = vld [vmem:[%s532] sm:$0xff]
        %v611 = vld [vmem:[%s532 + $0x8] sm:$0xff]
        %v612 = vld [vmem:[%s532 + $0x10] sm:$0x1]
        %v613 = vld [vmem:[%s532 + $0x18] sm:$0x1]
        %v614 = vld [vmem:[%s487] sm:$0xff]
        %v615 = vld [vmem:[%s487 + $0x8] sm:$0x11]
        %v616 = vunpack.c.l.bf16 %v614
        %v617 = vunpack.c.h.bf16 %v614
        %v618 = vunpack.c.l.bf16 %v615
        %v619 = vunpack.c.h.bf16 %v615
        %v620 = vld [vmem:[%s496] sm:$0xff]
        %v621 = vld [vmem:[%s496 + $0x8] sm:$0x11]
        %v622 = vunpack.c.l.bf16 %v620
        %v623 = vunpack.c.h.bf16 %v620
        %v624 = vunpack.c.l.bf16 %v621
        %v625 = vunpack.c.h.bf16 %v621
        %v626 = vld [vmem:[%s505] sm:$0xff]
        %v627 = vld [vmem:[%s505 + $0x8] sm:$0x11]
        %v628 = vunpack.c.l.bf16 %v626
        %v629 = vunpack.c.h.bf16 %v626
        %v630 = vunpack.c.l.bf16 %v627
        %v631 = vunpack.c.h.bf16 %v627
        %v632 = vld [vmem:[%s514] sm:$0xff]
        %v633 = vld [vmem:[%s514 + $0x8] sm:$0x11]
        %v634 = vunpack.c.l.bf16 %v632
        %v635 = vunpack.c.h.bf16 %v632
        %v636 = vunpack.c.l.bf16 %v633
        %v637 = vunpack.c.h.bf16 %v633
        %v638 = vsub.f32 %v622, %v616
        %v639 = vsub.f32 %v623, %v617
        %v640 = vsub.f32 %v624, %v618
        %v641 = vsub.f32 %v625, %v619
        %v642 = vmul.f32 %v606, %v638
        %v643 = vmul.f32 %v607, %v639
        %v644 = vmul.f32 %v608, %v640
        %v645 = vmul.f32 %v609, %v641
        %v646 = vadd.f32 %v616, %v642
        %v647 = vadd.f32 %v617, %v643
        %v648 = vadd.f32 %v618, %v644
        %v649 = vadd.f32 %v619, %v645
        %v650 = vsub.f32 %v634, %v628
        %v651 = vsub.f32 %v635, %v629
        %v652 = vsub.f32 %v636, %v630
        %v653 = vsub.f32 %v637, %v631
        %v654 = vmul.f32 %v606, %v650
        %v655 = vmul.f32 %v607, %v651
        %v656 = vmul.f32 %v608, %v652
        %v657 = vmul.f32 %v609, %v653
        %v658 = vadd.f32 %v628, %v654
        %v659 = vadd.f32 %v629, %v655
        %v660 = vadd.f32 %v630, %v656
        %v661 = vadd.f32 %v631, %v657
        %v662 = vsub.f32 %v658, %v646
        %v663 = vsub.f32 %v659, %v647
        %v664 = vsub.f32 %v660, %v648
        %v665 = vsub.f32 %v661, %v649
        %v666 = vmul.f32 %v610, %v662
        %v667 = vmul.f32 %v611, %v663
        %v668 = vmul.f32 %v612, %v664
        %v669 = vmul.f32 %v613, %v665
        %v670 = vadd.f32 %v646, %v666
        %v671 = vadd.f32 %v647, %v667
        %v672 = vadd.f32 %v648, %v668
        %v673 = vadd.f32 %v649, %v669
        %v674 = vld [vmem:[#allocation13] sm:$0xf]
        %v675 = vpack.c.bf16 %v672, %v670
        %v676 = vpack.c.bf16 %v673, %v671
        %s677 = scalar_lea.vmem %s487, 16 [#allocation2]
        %v678 = vld [vmem:[%s677] sm:$0xff]
        %v679 = vld [vmem:[%s677 + $0x8] sm:$0x11]
        %v680 = vunpack.c.l.bf16 %v678
        %v681 = vunpack.c.h.bf16 %v678
        %v682 = vunpack.c.l.bf16 %v679
        %v683 = vunpack.c.h.bf16 %v679
        %s684 = scalar_lea.vmem %s496, 16 [#allocation5]
        %v685 = vld [vmem:[%s684] sm:$0xff]
        %v686 = vld [vmem:[%s684 + $0x8] sm:$0x11]
        %v687 = vunpack.c.l.bf16 %v685
        %v688 = vunpack.c.h.bf16 %v685
        %v689 = vunpack.c.l.bf16 %v686
        %v690 = vunpack.c.h.bf16 %v686
        %s691 = scalar_lea.vmem %s505, 16 [#allocation7]
        %v692 = vld [vmem:[%s691] sm:$0xff]
        %v693 = vld [vmem:[%s691 + $0x8] sm:$0x11]
        %v694 = vunpack.c.l.bf16 %v692
        %v695 = vunpack.c.h.bf16 %v692
        %v696 = vunpack.c.l.bf16 %v693
        %v697 = vunpack.c.h.bf16 %v693
        %s698 = scalar_lea.vmem %s514, 16 [#allocation8]
        %v699 = vld [vmem:[%s698] sm:$0xff]
        %v700 = vld [vmem:[%s698 + $0x8] sm:$0x11]
        %v701 = vunpack.c.l.bf16 %v699
        %v702 = vunpack.c.h.bf16 %v699
        %v703 = vunpack.c.l.bf16 %v700
        %v704 = vunpack.c.h.bf16 %v700
        %v705 = vsub.f32 %v687, %v680
        %v706 = vsub.f32 %v688, %v681
        %v707 = vsub.f32 %v689, %v682
        %v708 = vsub.f32 %v690, %v683
        %v709 = vmul.f32 %v606, %v705
        %v710 = vmul.f32 %v607, %v706
        %v711 = vmul.f32 %v608, %v707
        %v712 = vmul.f32 %v609, %v708
        %v713 = vadd.f32 %v680, %v709
        %v714 = vadd.f32 %v681, %v710
        %v715 = vadd.f32 %v682, %v711
        %v716 = vadd.f32 %v683, %v712
        %v717 = vsub.f32 %v701, %v694
        %v718 = vsub.f32 %v702, %v695
        %v719 = vsub.f32 %v703, %v696
        %v720 = vsub.f32 %v704, %v697
        %v721 = vmul.f32 %v606, %v717
        %v722 = vmul.f32 %v607, %v718
        %v723 = vmul.f32 %v608, %v719
        %v724 = vmul.f32 %v609, %v720
        %v725 = vadd.f32 %v694, %v721
        %v726 = vadd.f32 %v695, %v722
        %v727 = vadd.f32 %v696, %v723
        %v728 = vadd.f32 %v697, %v724
        %v729 = vsub.f32 %v725, %v713
        %v730 = vsub.f32 %v726, %v714
        %v731 = vsub.f32 %v727, %v715
        %v732 = vsub.f32 %v728, %v716
        %v733 = vmul.f32 %v610, %v729
        %v734 = vmul.f32 %v611, %v730
        %v735 = vmul.f32 %v612, %v731
        %v736 = vmul.f32 %v613, %v732
        %v737 = vadd.f32 %v713, %v733
        %v738 = vadd.f32 %v714, %v734
        %v739 = vadd.f32 %v715, %v735
        %v740 = vadd.f32 %v716, %v736
        %s741 = scalar_lea.vmem [#allocation13], 4
        %v742 = vld [vmem:[%s741] sm:$0xf]
        %v743 = vpack.c.bf16 %v739, %v737
        %v744 = vpack.c.bf16 %v740, %v738
        %vm745 = vcmask 72704
        %v747 = vsel %vm745, %v742, 0
        %vm749 = vcmask 1043456
        %vm750 = vcmask 1044480
        %v751 = vsel %vm749, 4294967295, 65535
        %v752 = vsel %vm750, %v751, 0
        %v754 = vand.u32 %v743, %v752
        %v757 = vand.u32 %v744, %v752
        %759 = vmatprep.subr.bf16.mxu0 %v757
        %760 = vmatpush1.bf16.msra.mxu0 %v754
        %761 = vmatprep.subr.bf16.mxu0 0
        %762 = vmatpush1.bf16.msra.mxu0 0
        %763 = vmatprep.subr.bf16.mxu0 0
        %764 = vmatpush1.bf16.msra.mxu0 0
        %765 = vmatprep.subr.bf16.mxu0 0
        %766 = vmatpush1.bf16.msra.mxu0 0
        %767 = vmatprep.subr.bf16.mxu0 0
        %768 = vmatpush1.bf16.msra.mxu0 0
        %769 = vmatprep.subr.bf16.mxu0 0
        %770 = vmatpush1.bf16.msra.mxu0 0
        %771 = vmatprep.subr.bf16.mxu0 0
        %772 = vmatpush1.bf16.msra.mxu0 0
        %773 = vmatprep.subr.bf16.mxu0 0
        %774 = vmatpush1.bf16.msra.mxu0 0
        %775 = vmatprep.subr.bf16.mxu0 0
        %776 = vmatpush1.bf16.msra.mxu0 0
        %777 = vmatprep.subr.bf16.mxu0 0
        %778 = vmatpush1.bf16.msra.mxu0 0
        %779 = vmatprep.subr.bf16.mxu0 0
        %780 = vmatpush1.bf16.msra.mxu0 0
        %781 = vmatprep.subr.bf16.mxu0 0
        %782 = vmatpush1.bf16.msra.mxu0 0
        %783 = vmatprep.subr.bf16.mxu0 0
        %784 = vmatpush1.bf16.msra.mxu0 0
        %785 = vmatprep.subr.bf16.mxu0 0
        %786 = vmatpush1.bf16.msra.mxu0 0
        %787 = vmatprep.subr.bf16.mxu0 0
        %788 = vmatpush1.bf16.msra.mxu0 0
        %789 = vmatprep.subr.bf16.mxu0 0
        %790 = vmatpush1.bf16.msra.mxu0 0
        %791 = vmatprep.mubr.bf16.mxu0 0
        %792 = vmatmul.mubr.bf16.gmra.mrb[0].mxu0 %v747
        %v793 = vpop.f32.mrb[0].mxu0
        %v794 = vadd.f32 0.0, %v793
        %v795 = vpop.f32.mrb[0].mxu0
        %v796 = vadd.f32 0.0, %v795
        %v797 = vpop.f32.mrb[0].mxu0
        %v798 = vpop.f32.mrb[0].mxu0
        %799 = vdwg.mxu0
        %v801 = vsel %vm745, %v674, 0
        %v804 = vand.u32 %v675, %v752
        %v807 = vand.u32 %v676, %v752
        %809 = vmatprep.subr.bf16.mxu0 %v807
        %810 = vmatpush1.bf16.msra.mxu0 %v804
        %811 = vmatprep.subr.bf16.mxu0 0
        %812 = vmatpush1.bf16.msra.mxu0 0
        %813 = vmatprep.subr.bf16.mxu0 0
        %814 = vmatpush1.bf16.msra.mxu0 0
        %815 = vmatprep.subr.bf16.mxu0 0
        %816 = vmatpush1.bf16.msra.mxu0 0
        %817 = vmatprep.subr.bf16.mxu0 0
        %818 = vmatpush1.bf16.msra.mxu0 0
        %819 = vmatprep.subr.bf16.mxu0 0
        %820 = vmatpush1.bf16.msra.mxu0 0
        %821 = vmatprep.subr.bf16.mxu0 0
        %822 = vmatpush1.bf16.msra.mxu0 0
        %823 = vmatprep.subr.bf16.mxu0 0
        %824 = vmatpush1.bf16.msra.mxu0 0
        %825 = vmatprep.subr.bf16.mxu0 0
        %826 = vmatpush1.bf16.msra.mxu0 0
        %827 = vmatprep.subr.bf16.mxu0 0
        %828 = vmatpush1.bf16.msra.mxu0 0
        %829 = vmatprep.subr.bf16.mxu0 0
        %830 = vmatpush1.bf16.msra.mxu0 0
        %831 = vmatprep.subr.bf16.mxu0 0
        %832 = vmatpush1.bf16.msra.mxu0 0
        %833 = vmatprep.subr.bf16.mxu0 0
        %834 = vmatpush1.bf16.msra.mxu0 0
        %835 = vmatprep.subr.bf16.mxu0 0
        %836 = vmatpush1.bf16.msra.mxu0 0
        %837 = vmatprep.subr.bf16.mxu0 0
        %838 = vmatpush1.bf16.msra.mxu0 0
        %839 = vmatprep.subr.bf16.mxu0 0
        %840 = vmatpush1.bf16.msra.mxu0 0
        %841 = vmatprep.mubr.bf16.mxu0 0
        %842 = vmatmul.mubr.bf16.gmra.mrb[0].mxu0 %v801
        %v843 = vpop.f32.mrb[0].mxu0
        %v844 = vadd.f32 %v794, %v843
        %v845 = vpop.f32.mrb[0].mxu0
        %v846 = vadd.f32 %v796, %v845
        %v847 = vpop.f32.mrb[0].mxu0
        %v848 = vpop.f32.mrb[0].mxu0
        %849 = vdwg.mxu0
        %s850 = scalar_lea.vmem %s487, 32 [#allocation2]
        %v851 = vld [vmem:[%s850] sm:$0xff]
        %v852 = vld [vmem:[%s850 + $0x8] sm:$0x11]
        %v853 = vunpack.c.l.bf16 %v851
        %v854 = vunpack.c.h.bf16 %v851
        %v855 = vunpack.c.l.bf16 %v852
        %v856 = vunpack.c.h.bf16 %v852
        %s857 = scalar_lea.vmem %s496, 32 [#allocation5]
        %v858 = vld [vmem:[%s857] sm:$0xff]
        %v859 = vld [vmem:[%s857 + $0x8] sm:$0x11]
        %v860 = vunpack.c.l.bf16 %v858
        %v861 = vunpack.c.h.bf16 %v858
        %v862 = vunpack.c.l.bf16 %v859
        %v863 = vunpack.c.h.bf16 %v859
        %s864 = scalar_lea.vmem %s505, 32 [#allocation7]
        %v865 = vld [vmem:[%s864] sm:$0xff]
        %v866 = vld [vmem:[%s864 + $0x8] sm:$0x11]
        %v867 = vunpack.c.l.bf16 %v865
        %v868 = vunpack.c.h.bf16 %v865
        %v869 = vunpack.c.l.bf16 %v866
        %v870 = vunpack.c.h.bf16 %v866
        %s871 = scalar_lea.vmem %s514, 32 [#allocation8]
        %v872 = vld [vmem:[%s871] sm:$0xff]
        %v873 = vld [vmem:[%s871 + $0x8] sm:$0x11]
        %v874 = vunpack.c.l.bf16 %v872
        %v875 = vunpack.c.h.bf16 %v872
        %v876 = vunpack.c.l.bf16 %v873
        %v877 = vunpack.c.h.bf16 %v873
        %v878 = vsub.f32 %v860, %v853
        %v879 = vsub.f32 %v861, %v854
        %v880 = vsub.f32 %v862, %v855
        %v881 = vsub.f32 %v863, %v856
        %v882 = vmul.f32 %v606, %v878
        %v883 = vmul.f32 %v607, %v879
        %v884 = vmul.f32 %v608, %v880
        %v885 = vmul.f32 %v609, %v881
        %v886 = vadd.f32 %v853, %v882
        %v887 = vadd.f32 %v854, %v883
        %v888 = vadd.f32 %v855, %v884
        %v889 = vadd.f32 %v856, %v885
        %v890 = vsub.f32 %v874, %v867
        %v891 = vsub.f32 %v875, %v868
        %v892 = vsub.f32 %v876, %v869
        %v893 = vsub.f32 %v877, %v870
        %v894 = vmul.f32 %v606, %v890
        %v895 = vmul.f32 %v607, %v891
        %v896 = vmul.f32 %v608, %v892
        %v897 = vmul.f32 %v609, %v893
        %v898 = vadd.f32 %v867, %v894
        %v899 = vadd.f32 %v868, %v895
        %v900 = vadd.f32 %v869, %v896
        %v901 = vadd.f32 %v870, %v897
        %v902 = vsub.f32 %v898, %v886
        %v903 = vsub.f32 %v899, %v887
        %v904 = vsub.f32 %v900, %v888
        %v905 = vsub.f32 %v901, %v889
        %v906 = vmul.f32 %v610, %v902
        %v907 = vmul.f32 %v611, %v903
        %v908 = vmul.f32 %v612, %v904
        %v909 = vmul.f32 %v613, %v905
        %v910 = vadd.f32 %v886, %v906
        %v911 = vadd.f32 %v887, %v907
        %v912 = vadd.f32 %v888, %v908
        %v913 = vadd.f32 %v889, %v909
        %s914 = scalar_lea.vmem [#allocation13], 8
        %v915 = vld [vmem:[%s914] sm:$0xf]
        %v916 = vpack.c.bf16 %v912, %v910
        %v917 = vpack.c.bf16 %v913, %v911
        %v919 = vsel %vm745, %v915, 0
        %v922 = vand.u32 %v916, %v752
        %v925 = vand.u32 %v917, %v752
        %927 = vmatprep.subr.bf16.mxu0 %v925
        %928 = vmatpush1.bf16.msra.mxu0 %v922
        %929 = vmatprep.subr.bf16.mxu0 0
        %930 = vmatpush1.bf16.msra.mxu0 0
        %931 = vmatprep.subr.bf16.mxu0 0
        %932 = vmatpush1.bf16.msra.mxu0 0
        %933 = vmatprep.subr.bf16.mxu0 0
        %934 = vmatpush1.bf16.msra.mxu0 0
        %935 = vmatprep.subr.bf16.mxu0 0
        %936 = vmatpush1.bf16.msra.mxu0 0
        %937 = vmatprep.subr.bf16.mxu0 0
        %938 = vmatpush1.bf16.msra.mxu0 0
        %939 = vmatprep.subr.bf16.mxu0 0
        %940 = vmatpush1.bf16.msra.mxu0 0
        %941 = vmatprep.subr.bf16.mxu0 0
        %942 = vmatpush1.bf16.msra.mxu0 0
        %943 = vmatprep.subr.bf16.mxu0 0
        %944 = vmatpush1.bf16.msra.mxu0 0
        %945 = vmatprep.subr.bf16.mxu0 0
        %946 = vmatpush1.bf16.msra.mxu0 0
        %947 = vmatprep.subr.bf16.mxu0 0
        %948 = vmatpush1.bf16.msra.mxu0 0
        %949 = vmatprep.subr.bf16.mxu0 0
        %950 = vmatpush1.bf16.msra.mxu0 0
        %951 = vmatprep.subr.bf16.mxu0 0
        %952 = vmatpush1.bf16.msra.mxu0 0
        %953 = vmatprep.subr.bf16.mxu0 0
        %954 = vmatpush1.bf16.msra.mxu0 0
        %955 = vmatprep.subr.bf16.mxu0 0
        %956 = vmatpush1.bf16.msra.mxu0 0
        %957 = vmatprep.subr.bf16.mxu0 0
        %958 = vmatpush1.bf16.msra.mxu0 0
        %959 = vmatprep.mubr.bf16.mxu0 0
        %960 = vmatmul.mubr.bf16.gmra.mrb[0].mxu0 %v919
        %v961 = vpop.f32.mrb[0].mxu0
        %v962 = vadd.f32 0.0, %v961
        %v963 = vpop.f32.mrb[0].mxu0
        %v964 = vadd.f32 0.0, %v963
        %v965 = vpop.f32.mrb[0].mxu0
        %v966 = vpop.f32.mrb[0].mxu0
        %967 = vdwg.mxu0
        %v968 = vadd.f32 %v844, %v962
        %v969 = vadd.f32 %v846, %v964
        %s970 = scalar_lea.vmem %s487, 48 [#allocation2]
        %v971 = vld [vmem:[%s970] sm:$0xff]
        %v972 = vld [vmem:[%s970 + $0x8] sm:$0x11]
        %v973 = vunpack.c.l.bf16 %v971
        %v974 = vunpack.c.h.bf16 %v971
        %v975 = vunpack.c.l.bf16 %v972
        %v976 = vunpack.c.h.bf16 %v972
        %s977 = scalar_lea.vmem %s496, 48 [#allocation5]
        %v978 = vld [vmem:[%s977] sm:$0xff]
        %v979 = vld [vmem:[%s977 + $0x8] sm:$0x11]
        %v980 = vunpack.c.l.bf16 %v978
        %v981 = vunpack.c.h.bf16 %v978
        %v982 = vunpack.c.l.bf16 %v979
        %v983 = vunpack.c.h.bf16 %v979
        %s984 = scalar_lea.vmem %s505, 48 [#allocation7]
        %v985 = vld [vmem:[%s984] sm:$0xff]
        %v986 = vld [vmem:[%s984 + $0x8] sm:$0x11]
        %v987 = vunpack.c.l.bf16 %v985
        %v988 = vunpack.c.h.bf16 %v985
        %v989 = vunpack.c.l.bf16 %v986
        %v990 = vunpack.c.h.bf16 %v986
        %s991 = scalar_lea.vmem %s514, 48 [#allocation8]
        %v992 = vld [vmem:[%s991] sm:$0xff]
        %v993 = vld [vmem:[%s991 + $0x8] sm:$0x11]
        %v994 = vunpack.c.l.bf16 %v992
        %v995 = vunpack.c.h.bf16 %v992
        %v996 = vunpack.c.l.bf16 %v993
        %v997 = vunpack.c.h.bf16 %v993
        %v998 = vsub.f32 %v980, %v973
        %v999 = vsub.f32 %v981, %v974
        %v1000 = vsub.f32 %v982, %v975
        %v1001 = vsub.f32 %v983, %v976
        %v1002 = vmul.f32 %v606, %v998
        %v1003 = vmul.f32 %v607, %v999
        %v1004 = vmul.f32 %v608, %v1000
        %v1005 = vmul.f32 %v609, %v1001
        %v1006 = vadd.f32 %v973, %v1002
        %v1007 = vadd.f32 %v974, %v1003
        %v1008 = vadd.f32 %v975, %v1004
        %v1009 = vadd.f32 %v976, %v1005
        %v1010 = vsub.f32 %v994, %v987
        %v1011 = vsub.f32 %v995, %v988
        %v1012 = vsub.f32 %v996, %v989
        %v1013 = vsub.f32 %v997, %v990
        %v1014 = vmul.f32 %v606, %v1010
        %v1015 = vmul.f32 %v607, %v1011
        %v1016 = vmul.f32 %v608, %v1012
        %v1017 = vmul.f32 %v609, %v1013
        %v1018 = vadd.f32 %v987, %v1014
        %v1019 = vadd.f32 %v988, %v1015
        %v1020 = vadd.f32 %v989, %v1016
        %v1021 = vadd.f32 %v990, %v1017
        %v1022 = vsub.f32 %v1018, %v1006
        %v1023 = vsub.f32 %v1019, %v1007
        %v1024 = vsub.f32 %v1020, %v1008
        %v1025 = vsub.f32 %v1021, %v1009
        %v1026 = vmul.f32 %v610, %v1022
        %v1027 = vmul.f32 %v611, %v1023
        %v1028 = vmul.f32 %v612, %v1024
        %v1029 = vmul.f32 %v613, %v1025
        %v1030 = vadd.f32 %v1006, %v1026
        %v1031 = vadd.f32 %v1007, %v1027
        %v1032 = vadd.f32 %v1008, %v1028
        %v1033 = vadd.f32 %v1009, %v1029
        %s1034 = scalar_lea.vmem [#allocation13], 12
        %v1035 = vld [vmem:[%s1034] sm:$0xf]
        %v1036 = vpack.c.bf16 %v1032, %v1030
        %v1037 = vpack.c.bf16 %v1033, %v1031
        %v1039 = vsel %vm745, %v1035, 0
        %v1042 = vand.u32 %v1036, %v752
        %v1045 = vand.u32 %v1037, %v752
        %1047 = vmatprep.subr.bf16.mxu0 %v1045
        %1048 = vmatpush1.bf16.msra.mxu0 %v1042
        %1049 = vmatprep.subr.bf16.mxu0 0
        %1050 = vmatpush1.bf16.msra.mxu0 0
        %1051 = vmatprep.subr.bf16.mxu0 0
        %1052 = vmatpush1.bf16.msra.mxu0 0
        %1053 = vmatprep.subr.bf16.mxu0 0
        %1054 = vmatpush1.bf16.msra.mxu0 0
        %1055 = vmatprep.subr.bf16.mxu0 0
        %1056 = vmatpush1.bf16.msra.mxu0 0
        %1057 = vmatprep.subr.bf16.mxu0 0
        %1058 = vmatpush1.bf16.msra.mxu0 0
        %1059 = vmatprep.subr.bf16.mxu0 0
        %1060 = vmatpush1.bf16.msra.mxu0 0
        %1061 = vmatprep.subr.bf16.mxu0 0
        %1062 = vmatpush1.bf16.msra.mxu0 0
        %1063 = vmatprep.subr.bf16.mxu0 0
        %1064 = vmatpush1.bf16.msra.mxu0 0
        %1065 = vmatprep.subr.bf16.mxu0 0
        %1066 = vmatpush1.bf16.msra.mxu0 0
        %1067 = vmatprep.subr.bf16.mxu0 0
        %1068 = vmatpush1.bf16.msra.mxu0 0
        %1069 = vmatprep.subr.bf16.mxu0 0
        %1070 = vmatpush1.bf16.msra.mxu0 0
        %1071 = vmatprep.subr.bf16.mxu0 0
        %1072 = vmatpush1.bf16.msra.mxu0 0
        %1073 = vmatprep.subr.bf16.mxu0 0
        %1074 = vmatpush1.bf16.msra.mxu0 0
        %1075 = vmatprep.subr.bf16.mxu0 0
        %1076 = vmatpush1.bf16.msra.mxu0 0
        %1077 = vmatprep.subr.bf16.mxu0 0
        %1078 = vmatpush1.bf16.msra.mxu0 0
        %1079 = vmatprep.mubr.bf16.mxu0 0
        %1080 = vmatmul.mubr.bf16.gmra.mrb[0].mxu0 %v1039
        %v1081 = vpop.f32.mrb[0].mxu0
        %v1082 = vadd.f32 0.0, %v1081
        %v1083 = vpop.f32.mrb[0].mxu0
        %v1084 = vadd.f32 0.0, %v1083
        %v1085 = vpop.f32.mrb[0].mxu0
        %v1086 = vpop.f32.mrb[0].mxu0
        %1087 = vdwg.mxu0
        %v1088 = vadd.f32 %v968, %v1082
        %v1089 = vadd.f32 %v969, %v1084
        %v1090 = vld [vmem:[#allocation14] sm:$0xff]
        %1092 = vset.pattern.permute.xlu0 0
        %1093 = vperm.xlu0 %1092, %v1090
        %v1094 = vpop.permute.xlu0 %1093
        %v1096 = vadd.f32 %v1088, %v1094
        %v1097 = vadd.f32 %v1089, %v1094
        %1098 = vst [vmem:[%s597] sm:$0xff] %v1096
        %1099 = vst [vmem:[%s597 + $0x8] sm:$0xff] %v1097
        %s1100 = sand.u32 %s277, 1
        %s1101 = scalar_lea.sflag [#allocation4], %s1100
        %s1102 = sand.u32 %s277, 1
        %s1103 = smul.addr %s1102, 16
        %s1104 = scalar_lea.vmem [#allocation16], %s1103
        // Predicated region
        $region85: #{tpu_custom_call.1} parent=51 // pred_check
          %p1105 = pneg %p287
        $region86: #{tpu_custom_call.1} parent=51 // pred_check_branch
          %1107 = sbr.rel (%p1105) target = $region88
        $region87: #{tpu_custom_call.1} parent=51 // pred_region
          %s1108 = smul.u32 2, %s40
          %s1110 = ssub.s32 256, 256
          %1111 = vsyncadd %s1101, %s1110
          %s1112 = smul.addr %s39, 4
          %s1113 = sadd.s32 %s1108, %s1112
          %s1114 = smul.addr %s1113, 128
          %s1115 = scalar_lea.hbm %s8, %s1114
          %s1117 = sshll.u32 %s1104, 4
          %s1118 = int_to_ptr.vmem [resolvable:$true] %s1117
          %1120 = dma.vmem_to_hbm [thread:$0]  %s1118, 256, %s1115, %s1101
        $region88: #{tpu_custom_call.1} parent=51 // pred_fallthru
          _
      $region52: #{tpu_custom_call.1} parent=5 // pred_fallthru
        _
      %p1121 = scmp.le.s32.totalorder 2, %s30
      // Predicated region
      $region89: #{tpu_custom_call.1} parent=5 // pred_check
        %p1122 = pneg %p1121
      $region90: #{tpu_custom_call.1} parent=5 // pred_check_branch
        %1124 = sbr.rel (%p1122) target = $region92
      $region91: #{tpu_custom_call.1} parent=5 // pred_region
        %s1125 = ssub.s32 %s30, 2
        // Predicated region
        $region93: #{tpu_custom_call.1} parent=91 // pred_check
          %p1126 = pneg %p293
        $region94: #{tpu_custom_call.1} parent=91 // pred_check_branch
          %1128 = sbr.rel (%p1126) target = $region96
        $region95: #{tpu_custom_call.1} parent=91 // pred_region
          %s1129 = sand.u32 %s278, 1
          %s1130 = scalar_lea.sflag [#allocation4], %s1129
          %s1131 = sand.u32 %s278, 1
          %s1132 = smul.addr %s1131, 16
          %s1133 = scalar_lea.vmem [#allocation16], %s1132
          %1134 = dma.done %s1130, 256
        $region96: #{tpu_custom_call.1} parent=91 // pred_fallthru
          _
      $region92: #{tpu_custom_call.1} parent=5 // pred_fallthru
        _
    $region6: #{tpu_custom_call.1} parent=1 // loop_footer
      %s34 = sadd.s32 1, %s30
    $region7: #{tpu_custom_call.1} parent=1 // loop_footer_branch
      %29 = sbr.rel target = $region3
    $region8: #{tpu_custom_call.1} parent=1 // loop_exit
      _
    %1135 = vsyncpa [#allocation3], 1
    %s1136 = scalar_lea.sflag [#allocation3], 1
    %1137 = vsyncpa %s1136, 1
    %1138 = vsyncpa [#allocation6], 1
    %s1139 = scalar_lea.sflag [#allocation6], 1
    %1140 = vsyncpa %s1139, 1
    %1141 = vsyncpa [#allocation9], 1
    %s1142 = scalar_lea.sflag [#allocation9], 1
    %1143 = vsyncpa %s1142, 1
    %1144 = vsyncpa [#allocation12], 1
    %s1145 = scalar_lea.sflag [#allocation12], 1
    %1146 = vsyncpa %s1145, 1
    %1147 = vsyncpa [#allocation15], 1
    %1148 = vsyncpa [#allocation4], 1
    %s1149 = scalar_lea.sflag [#allocation4], 1
    %1150 = vsyncpa %s1149, 1

</llo_original>
